<compile_context>
chip_gen: v7x
topology: tpu7x:2x2x1
jax: 0.10.0
libtpu: 0.0.40
codegen_flags: <defaults>
</compile_context>

<pallas_src>
import functools

import jax
import jax.numpy as jnp
from jax import lax, random
from jax.experimental import pallas as pl
from jax.experimental.pallas import tpu as pltpu


# ----------------------------- Pallas kernel ------------------------------ #

def _cell_kernel(hid,
                 cols_ref, w_ref, c_ref, wci_ref, wco_ref,
                 h_out_ref, c_out_ref):
    C = hid

    # Single fused MXU matmul:
    #   acts = [BN_scale * Wx | Wh | fused_bias] @ [x_cols; h_cols; ones]
    #        = BN(convX(x)) + convH(h)            shape (4*Chid, S_tile)
    acts = jnp.dot(w_ref[...], cols_ref[...],
                   preferred_element_type=jnp.float32)

    c_cur = c_ref[...]                  # (Chid, S_tile)
    wci = wci_ref[...]                  # (1, S_tile) — broadcasts over sublanes
    wco = wco_ref[...]                  # (1, S_tile)

    # torch.split(..., hidden, dim=1) order along the sublane axis: i, f, o, g
    i = jax.nn.sigmoid(acts[0 * C:1 * C, :] + c_cur * wci)
    # Faithful to the module: W_cf = self.W_co(c_cur) (W_cf weights unused).
    f = jax.nn.sigmoid(acts[1 * C:2 * C, :] + c_cur * wco)
    c_next = f * c_cur + i * jnp.tanh(acts[3 * C:4 * C, :])
    o = jax.nn.sigmoid(acts[2 * C:3 * C, :] + c_next * wco)
    h_next = o * jnp.tanh(c_next)

    h_out_ref[...] = h_next.astype(h_out_ref.dtype)
    c_out_ref[...] = c_next.astype(c_out_ref.dtype)


# ------------------------------- JAX glue ---------------------------------- #

def _round_up(x, m):
    return (x + m - 1) // m * m


def _pick_tile(S, Kp, Chid, Cout, budget_bytes=12 << 20):
    """Largest lane-dense spatial tile whose per-step VMEM footprint
    (double-buffered I/O + resident weight + matmul result) fits a budget
    that is safe under the default scoped-VMEM limit on v5e/v6e/v7x."""
    s_cap = _round_up(S, 128)
    for ts in (2048, 1024, 512, 256, 128):
        if ts > s_cap:
            continue
        per_step = (4 * ts * (2 * Kp          # cols (x2 buffers)
                              + 2 * Chid      # c_cur (x2)
                              + 4             # wci + wco (x2 each)
                              + 4 * Chid      # h_out + c_out (x2 each)
                              + Cout)         # matmul result scratch
                    + 8 * Cout * Kp)          # resident fused weight
        if per_step <= budget_bytes:
            return ts
    return 128


def _im2col_cs(x_nchw, kh, kw):
    """(B,C,H,W) -> (kh*kw*C, B*H*W) im2col columns, SAME padding,
    cross-correlation; K ordered (dy, dx, c), S ordered (b, h, w).
    Built channel-major so it lands directly in the kernel's (K, S) layout
    (no full-size HBM transpose of the im2col matrix)."""
    B, C, H, W = x_nchw.shape
    ph, pw = kh // 2, kw // 2
    x_cbhw = jnp.transpose(x_nchw, (1, 0, 2, 3))            # small transpose
    xp = jnp.pad(x_cbhw, ((0, 0), (0, 0), (ph, ph), (pw, pw)))
    rows = [xp[:, :, dy:dy + H, dx:dx + W].reshape(C, B * H * W)
            for dy in range(kh) for dx in range(kw)]
    return jnp.concatenate(rows, axis=0)                     # (kh*kw*C, S)


def marv_conv_lstm_cell(x_nchw, h_nchw, c_nchw, params):
    """Forward pass of MarvConvLSTMCell. Inputs/outputs are NCHW, float32."""
    B, Cin, H, W = x_nchw.shape
    Chid = h_nchw.shape[1]
    kh, kw = params["wx"].shape[2], params["wx"].shape[3]
    assert kh % 2 == 1 and kw % 2 == 1, "SAME-padding path assumes odd kernels"
    Cout = 4 * Chid
    HW = H * W
    S = B * HW                                     # fused batch*spatial axis

    # ---- im2col on host (XLA glue), directly in (K, S) layout.
    # TODO(synk): move a halo'd im2col into the kernel to cut the ~9x HBM
    # read inflation at realistic (101x201) spatial sizes.
    x_cols = _im2col_cs(x_nchw, kh, kw)            # (Kx, S)
    h_cols = _im2col_cs(h_nchw, kh, kw)            # (Kh, S)

    Kx = kh * kw * Cin
    Kh = kh * kw * Chid
    K = Kx + Kh + 1                                # +1: ones row carries bias
    Kp = _round_up(K, 128)

    cols = jnp.concatenate(
        [x_cols, h_cols, jnp.ones((1, S), x_nchw.dtype)], axis=0)  # (K, S)

    # ---- fold eval-mode BatchNorm + both conv biases into the fused weight.
    eps = 1e-5
    bn_scale = params["bn_gamma"] / jnp.sqrt(params["bn_var"] + eps)
    bn_shift = params["bn_beta"] - params["bn_mean"] * bn_scale
    wx_m = jnp.transpose(params["wx"], (0, 2, 3, 1)).reshape(Cout, Kx)
    wh_m = jnp.transpose(params["wh"], (0, 2, 3, 1)).reshape(Cout, Kh)
    fused_bias = bn_scale * params["bx"] + bn_shift + params["bh"]
    w_fused = jnp.concatenate(
        [wx_m * bn_scale[:, None], wh_m, fused_bias[:, None]], axis=1)
    w_fused = jnp.pad(w_fused, ((0, 0), (0, Kp - K)))      # (Cout, Kp)

    # ---- spatial tiling over the fused batch*H*W lane axis.
    TS = _pick_tile(S, Kp, Chid, Cout)
    S_pad = _round_up(S, TS)
    pad_s = S_pad - S

    cols = jnp.pad(cols, ((0, Kp - K), (0, pad_s)))        # (Kp, S_pad)
    c_cs = jnp.transpose(c_nchw.reshape(B, Chid, HW), (1, 0, 2)).reshape(Chid, S)
    c_cs = jnp.pad(c_cs, ((0, 0), (0, pad_s)))             # (Chid, S_pad)
    w_ci = jnp.pad(jnp.tile(params["w_ci"].reshape(-1), B),
                   (0, pad_s)).reshape(1, S_pad)
    w_co = jnp.pad(jnp.tile(params["w_co"].reshape(-1), B),
                   (0, pad_s)).reshape(1, S_pad)

    grid = (S_pad // TS,)
    kernel = functools.partial(_cell_kernel, Chid)

    flops = 2 * S_pad * Kp * Cout + 12 * S_pad * Chid
    transc = 5 * S_pad * Chid
    bytes_acc = 4 * (Kp * S_pad + Cout * Kp + 3 * Chid * S_pad + 2 * S_pad)

    h_cs, c_next_cs = pl.pallas_call(
        kernel,
        out_shape=(jax.ShapeDtypeStruct((Chid, S_pad), x_nchw.dtype),
                   jax.ShapeDtypeStruct((Chid, S_pad), x_nchw.dtype)),
        grid=grid,
        in_specs=[
            pl.BlockSpec((Kp, TS), lambda t: (0, t)),      # fused im2col cols
            pl.BlockSpec((Cout, Kp), lambda t: (0, 0)),    # fused weight (resident)
            pl.BlockSpec((Chid, TS), lambda t: (0, t)),    # c_cur
            pl.BlockSpec((1, TS), lambda t: (0, t)),       # Hadamard W_ci
            pl.BlockSpec((1, TS), lambda t: (0, t)),       # Hadamard W_co
        ],
        out_specs=(pl.BlockSpec((Chid, TS), lambda t: (0, t)),
                   pl.BlockSpec((Chid, TS), lambda t: (0, t))),
        compiler_params=pltpu.CompilerParams(
            dimension_semantics=("parallel",)),
        cost_estimate=pl.CostEstimate(
            flops=flops, transcendentals=transc, bytes_accessed=bytes_acc),
    )(cols, w_fused, c_cs, w_ci, w_co)

    h_next = (h_cs[:, :S].reshape(Chid, B, HW)
              .transpose(1, 0, 2).reshape(B, Chid, H, W))
    c_next = (c_next_cs[:, :S].reshape(Chid, B, HW)
              .transpose(1, 0, 2).reshape(B, Chid, H, W))
    return h_next, c_next


# --------------------------- pure-JAX reference ---------------------------- #

def ref_cell(x, h, c, params):
    eps = 1e-5
    convx = lax.conv_general_dilated(
        x, params["wx"], (1, 1), "SAME",
        dimension_numbers=("NCHW", "OIHW", "NCHW"))
    convx = convx + params["bx"][None, :, None, None]
    scale = params["bn_gamma"] / jnp.sqrt(params["bn_var"] + eps)
    shift = params["bn_beta"] - params["bn_mean"] * scale
    convx = convx * scale[None, :, None, None] + shift[None, :, None, None]

    convh = lax.conv_general_dilated(
        h, params["wh"], (1, 1), "SAME",
        dimension_numbers=("NCHW", "OIHW", "NCHW"))
    convh = convh + params["bh"][None, :, None, None]

    xi, xf, xo, xg = jnp.split(convx, 4, axis=1)
    hi, hf, ho, hg = jnp.split(convh, 4, axis=1)
    wci = params["w_ci"][None, None]
    wco = params["w_co"][None, None]

    i = jax.nn.sigmoid(xi + hi + c * wci)
    f = jax.nn.sigmoid(xf + hf + c * wco)   # module reuses W_co for the f gate
    c_next = f * c + i * jnp.tanh(xg + hg)
    o = jax.nn.sigmoid(xo + ho + c_next * wco)
    h_next = o * jnp.tanh(c_next)
    return h_next, c_next


# ---------------------------------- main ----------------------------------- #

if __name__ == "__main__":
    B, Cin, Chid, H, W = 2, 4, 32, 16, 16
    kh = kw = 3

    key = random.PRNGKey(0)
    ks = random.split(key, 12)
    params = {
        "wx": 0.1 * random.normal(ks[0], (4 * Chid, Cin, kh, kw), jnp.float32),
        "bx": 0.1 * random.normal(ks[1], (4 * Chid,), jnp.float32),
        "wh": 0.1 * random.normal(ks[2], (4 * Chid, Chid, kh, kw), jnp.float32),
        "bh": 0.1 * random.normal(ks[3], (4 * Chid,), jnp.float32),
        "bn_gamma": 1.0 + 0.1 * random.normal(ks[4], (4 * Chid,), jnp.float32),
        "bn_beta": 0.1 * random.normal(ks[5], (4 * Chid,), jnp.float32),
        "bn_mean": 0.1 * random.normal(ks[6], (4 * Chid,), jnp.float32),
        "bn_var": random.uniform(ks[7], (4 * Chid,), jnp.float32, 0.5, 1.5),
        "w_ci": 0.1 * random.normal(ks[8], (H, W), jnp.float32),
        "w_co": 0.1 * random.normal(ks[9], (H, W), jnp.float32),
        # W_cf parameter exists in the module but is never used in forward().
    }

    x = random.normal(ks[10], (B, Cin, H, W), jnp.float32)
    hc = random.normal(ks[11], (2, B, Chid, H, W), jnp.float32)
    h_cur, c_cur = hc[0], hc[1]

    h_next, c_next = jax.jit(marv_conv_lstm_cell)(x, h_cur, c_cur, params)
    jax.block_until_ready((h_next, c_next))

    h_ref, c_ref = ref_cell(x, h_cur, c_cur, params)
    assert h_next.shape == (B, Chid, H, W) and c_next.shape == (B, Chid, H, W)
    assert jnp.allclose(h_next, h_ref, atol=5e-5, rtol=5e-5)
    assert jnp.allclose(c_next, c_ref, atol=5e-5, rtol=5e-5)
    print("KERNEL_OK")
</pallas_src>

<mosaic_0001>
module attributes {stable_mosaic.version = 11 : i64} {
  func.func @_cell_kernel(%arg0: i32, %arg1: memref<384x512xf32, #tpu.memory_space<vmem>>, %arg2: memref<128x384xf32, #tpu.memory_space<vmem>>, %arg3: memref<32x512xf32, #tpu.memory_space<vmem>>, %arg4: memref<1x512xf32, #tpu.memory_space<vmem>>, %arg5: memref<1x512xf32, #tpu.memory_space<vmem>>, %arg6: memref<32x512xf32, #tpu.memory_space<vmem>>, %arg7: memref<32x512xf32, #tpu.memory_space<vmem>>) attributes {dimension_semantics = [#tpu.dimension_semantics<parallel>], iteration_bounds = array<i64: 1>, scalar_prefetch = 0 : i64, scratch_operands = 0 : i64, tpu.core_type = #tpu.core_type<tc>, window_params = [{transform_indices = @transform_0, window_bounds = array<i64: 384, 512>}, {pipeline_mode = #tpu.pipeline_mode<synchronous>, transform_indices = @transform_1, window_bounds = array<i64: 128, 384>}, {transform_indices = @transform_2, window_bounds = array<i64: 32, 512>}, {transform_indices = @transform_3, window_bounds = array<i64: 1, 512>}, {transform_indices = @transform_4, window_bounds = array<i64: 1, 512>}, {transform_indices = @transform_5, window_bounds = array<i64: 32, 512>}, {transform_indices = @transform_6, window_bounds = array<i64: 32, 512>}]} {
    %c0 = arith.constant 0 : index
    %c0_0 = arith.constant 0 : index
    %0 = vector.load %arg2[%c0, %c0_0] : memref<128x384xf32, #tpu.memory_space<vmem>>, vector<128x384xf32>
    %c0_1 = arith.constant 0 : index
    %c0_2 = arith.constant 0 : index
    %1 = vector.load %arg1[%c0_1, %c0_2] : memref<384x512xf32, #tpu.memory_space<vmem>>, vector<384x512xf32>
    %cst = arith.constant dense<0.000000e+00> : vector<128x512xf32>
    %2 = tpu.matmul %0, %1, %cst {dimension_numbers = #tpu.dot_dimension_numbers<[1], [0], [0], [1], [0, 0, 1, 1], [], []>} : vector<128x384xf32>, vector<384x512xf32>, vector<128x512xf32> -> vector<128x512xf32>
    %c0_3 = arith.constant 0 : index
    %c0_4 = arith.constant 0 : index
    %3 = vector.load %arg3[%c0_3, %c0_4] : memref<32x512xf32, #tpu.memory_space<vmem>>, vector<32x512xf32>
    %c0_5 = arith.constant 0 : index
    %c0_6 = arith.constant 0 : index
    %4 = vector.load %arg4[%c0_5, %c0_6] : memref<1x512xf32, #tpu.memory_space<vmem>>, vector<1x512xf32>
    %c0_7 = arith.constant 0 : index
    %c0_8 = arith.constant 0 : index
    %5 = vector.load %arg5[%c0_7, %c0_8] : memref<1x512xf32, #tpu.memory_space<vmem>>, vector<1x512xf32>
    %6 = vector.extract_strided_slice %2 {offsets = [0, 0], sizes = [32, 512], strides = [1, 1]} : vector<128x512xf32> to vector<32x512xf32>
    %7 = vector.broadcast %4 : vector<1x512xf32> to vector<32x512xf32>
    %8 = arith.mulf %3, %7 : vector<32x512xf32>
    %9 = arith.addf %6, %8 : vector<32x512xf32>
    %10 = arith.negf %9 : vector<32x512xf32>
    %11 = math.exp %10 : vector<32x512xf32>
    %cst_9 = arith.constant 1.000000e+00 : f32
    %12 = vector.broadcast %cst_9 : f32 to vector<32x512xf32>
    %13 = arith.addf %12, %11 : vector<32x512xf32>
    %14 = arith.divf %12, %13 : vector<32x512xf32>
    %15 = vector.extract_strided_slice %2 {offsets = [32, 0], sizes = [32, 512], strides = [1, 1]} : vector<128x512xf32> to vector<32x512xf32>
    %16 = vector.broadcast %5 : vector<1x512xf32> to vector<32x512xf32>
    %17 = arith.mulf %3, %16 : vector<32x512xf32>
    %18 = arith.addf %15, %17 : vector<32x512xf32>
    %19 = arith.negf %18 : vector<32x512xf32>
    %20 = math.exp %19 : vector<32x512xf32>
    %cst_10 = arith.constant 1.000000e+00 : f32
    %21 = vector.broadcast %cst_10 : f32 to vector<32x512xf32>
    %22 = arith.addf %21, %20 : vector<32x512xf32>
    %23 = arith.divf %21, %22 : vector<32x512xf32>
    %24 = arith.mulf %23, %3 : vector<32x512xf32>
    %25 = vector.extract_strided_slice %2 {offsets = [96, 0], sizes = [32, 512], strides = [1, 1]} : vector<128x512xf32> to vector<32x512xf32>
    %26 = math.tanh %25 : vector<32x512xf32>
    %27 = arith.mulf %14, %26 : vector<32x512xf32>
    %28 = arith.addf %24, %27 : vector<32x512xf32>
    %29 = vector.extract_strided_slice %2 {offsets = [64, 0], sizes = [32, 512], strides = [1, 1]} : vector<128x512xf32> to vector<32x512xf32>
    %30 = vector.broadcast %5 : vector<1x512xf32> to vector<32x512xf32>
    %31 = arith.mulf %28, %30 : vector<32x512xf32>
    %32 = arith.addf %29, %31 : vector<32x512xf32>
    %33 = arith.negf %32 : vector<32x512xf32>
    %34 = math.exp %33 : vector<32x512xf32>
    %cst_11 = arith.constant 1.000000e+00 : f32
    %35 = vector.broadcast %cst_11 : f32 to vector<32x512xf32>
    %36 = arith.addf %35, %34 : vector<32x512xf32>
    %37 = arith.divf %35, %36 : vector<32x512xf32>
    %38 = math.tanh %28 : vector<32x512xf32>
    %39 = arith.mulf %37, %38 : vector<32x512xf32>
    %c0_12 = arith.constant 0 : index
    %c0_13 = arith.constant 0 : index
    %40 = vector.load %arg6[%c0_12, %c0_13] : memref<32x512xf32, #tpu.memory_space<vmem>>, vector<32x512xf32>
    tpu.vector_store %arg6[%c0_12, %c0_13], %39 {strides = array<i32>} : memref<32x512xf32, #tpu.memory_space<vmem>>, vector<32x512xf32>,
    %c0_14 = arith.constant 0 : index
    %c0_15 = arith.constant 0 : index
    %41 = vector.load %arg7[%c0_14, %c0_15] : memref<32x512xf32, #tpu.memory_space<vmem>>, vector<32x512xf32>
    tpu.vector_store %arg7[%c0_14, %c0_15], %28 {strides = array<i32>} : memref<32x512xf32, #tpu.memory_space<vmem>>, vector<32x512xf32>,
    return
  }
  func.func @transform_0(%arg0: i32) -> (i32, i32) {
    %c0_i32 = arith.constant 0 : i32
    %c0_i32_0 = arith.constant 0 : i32
    return %c0_i32, %arg0 : i32, i32
  }
  func.func @transform_1(%arg0: i32) -> (i32, i32) {
    %c0_i32 = arith.constant 0 : i32
    %c0_i32_0 = arith.constant 0 : i32
    %c0_i32_1 = arith.constant 0 : i32
    return %c0_i32, %c0_i32_0 : i32, i32
  }
  func.func @transform_2(%arg0: i32) -> (i32, i32) {
    %c0_i32 = arith.constant 0 : i32
    %c0_i32_0 = arith.constant 0 : i32
    return %c0_i32, %arg0 : i32, i32
  }
  func.func @transform_3(%arg0: i32) -> (i32, i32) {
    %c0_i32 = arith.constant 0 : i32
    %c0_i32_0 = arith.constant 0 : i32
    return %c0_i32, %arg0 : i32, i32
  }
  func.func @transform_4(%arg0: i32) -> (i32, i32) {
    %c0_i32 = arith.constant 0 : i32
    %c0_i32_0 = arith.constant 0 : i32
    return %c0_i32, %arg0 : i32, i32
  }
  func.func @transform_5(%arg0: i32) -> (i32, i32) {
    %c0_i32 = arith.constant 0 : i32
    %c0_i32_0 = arith.constant 0 : i32
    return %c0_i32, %arg0 : i32, i32
  }
  func.func @transform_6(%arg0: i32) -> (i32, i32) {
    %c0_i32 = arith.constant 0 : i32
    %c0_i32_0 = arith.constant 0 : i32
    return %c0_i32, %arg0 : i32, i32
  }
}

</mosaic_0001>

<llo_original>
// kernel: tile.9
$region0: #{tile.9}
  %s0 = inlined_call_operand.vmem [shape: f32[16,16], index: 0, kind: input, shape index: {}]
  %s1 = inlined_call_operand.vmem [shape: f32[256], index: 1, kind: output, shape index: {}]
  $region1: #{tile.9} parent=0
    #allocation0 [shape = 'u8[4096]{0}', space=vmem, size = 0x1000, scoped, tag = 'scoped mem for output reshape']
    %s2 = smov 3
    %v3 = vld [vmem:[%s0] ss:$8 sm:%s2]
    %vm4 = vcmask 130048
    %5 = vst.msk [vmem:[#allocation0] sm:$0x3] %vm4, %v3
    %s6 = scalar_lea.vmem %s0, 7
    %s7 = smov 3
    %v8 = vld [vmem:[%s6] ss:$8 sm:%s7]
    %9 = vrot.lane.b32.xlu0 %v8, 112
    %v10 = vpop.permute.xlu0 %9
    %vm11 = vcmask 1048448
    %12 = vst.msk [vmem:[#allocation0] sm:$0x3] %vm11, %v10
    %s13 = scalar_lea.vmem %s0, 6
    %s14 = smov 3
    %v15 = vld [vmem:[%s13] ss:$8 sm:%s14]
    %16 = vrot.lane.b32.xlu0 %v15, 96
    %v17 = vpop.permute.xlu0 %16
    %vm18 = vcmask 917248
    %19 = vst.msk [vmem:[#allocation0] sm:$0x3] %vm18, %v17
    %s20 = scalar_lea.vmem %s0, 5
    %s21 = smov 3
    %v22 = vld [vmem:[%s20] ss:$8 sm:%s21]
    %23 = vrot.lane.b32.xlu0 %v22, 80
    %v24 = vpop.permute.xlu0 %23
    %vm25 = vcmask 786048
    %26 = vst.msk [vmem:[#allocation0] sm:$0x3] %vm25, %v24
    %s27 = scalar_lea.vmem %s0, 4
    %s28 = smov 3
    %v29 = vld [vmem:[%s27] ss:$8 sm:%s28]
    %30 = vrot.lane.b32.xlu0 %v29, 64
    %v31 = vpop.permute.xlu0 %30
    %vm32 = vcmask 654848
    %33 = vst.msk [vmem:[#allocation0] sm:$0x3] %vm32, %v31
    %s34 = scalar_lea.vmem %s0, 3
    %s35 = smov 3
    %v36 = vld [vmem:[%s34] ss:$8 sm:%s35]
    %37 = vrot.lane.b32.xlu0 %v36, 48
    %v38 = vpop.permute.xlu0 %37
    %vm39 = vcmask 523648
    %40 = vst.msk [vmem:[#allocation0] sm:$0x3] %vm39, %v38
    %s41 = scalar_lea.vmem %s0, 2
    %s42 = smov 3
    %v43 = vld [vmem:[%s41] ss:$8 sm:%s42]
    %44 = vrot.lane.b32.xlu0 %v43, 32
    %v45 = vpop.permute.xlu0 %44
    %vm46 = vcmask 392448
    %47 = vst.msk [vmem:[#allocation0] sm:$0x3] %vm46, %v45
    %s48 = scalar_lea.vmem %s0, 1
    %s49 = smov 3
    %v50 = vld [vmem:[%s48] ss:$8 sm:%s49]
    %51 = vrot.lane.b32.xlu0 %v50, 16
    %v52 = vpop.permute.xlu0 %51
    %vm53 = vcmask 261248
    %54 = vst.msk [vmem:[#allocation0] sm:$0x3] %vm53, %v52
    %s56 = sshllo.u32 0, 2
    %v58 = vld [vmem:[#allocation0] sm:%s56]
    %s59 = sshllo.u32 0, 2
    %60 = vst [vmem:[%s1] sm:%s59] %v58

// kernel: marv_conv_lstm_cell.1
$region0: #{marv_conv_lstm_cell.1}
  #allocation0 [shape = 'u32[]', space=smem, size = 0x4, offset = 0x4, fixed_abs, tag = 'smem constant byte address 0x4 - core index']
  #allocation1 [shape = 'u32[144,128]{1,0:T(1,128)}', space=vmem, size = 0x12000, scoped, tag = 'internal scratch']
  %s0 = inlined_call_operand.vmem [shape: f32[384,512], index: 0, kind: input, shape index: {}]
  %s1 = inlined_call_operand.vmem [shape: f32[128,384], index: 1, kind: input, shape index: {}]
  %s2 = inlined_call_operand.vmem [shape: f32[32,512], index: 2, kind: input, shape index: {}]
  %s3 = inlined_call_operand.vmem [shape: f32[1,512], index: 3, kind: input, shape index: {}]
  %s4 = inlined_call_operand.vmem [shape: f32[1,512], index: 4, kind: input, shape index: {}]
  %s5 = inlined_call_operand.vmem [shape: f32[32,512], index: 5, kind: output, shape index: {0}]
  %s6 = inlined_call_operand.vmem [shape: f32[32,512], index: 6, kind: output, shape index: {1}]
  %7 = xla_tuple %s5, %s6
  %s8 = sld [smem:[#allocation0]]
  $region38: #{marv_conv_lstm_cell.1} parent=0
    _
  %s10 = ssub.s32 1, %s8
  %s11 = scalar_select 0, %s10, %s8
  // Predicated region
  $region2: #{marv_conv_lstm_cell.1} parent=0 // pred_check
    _
  $region3: #{marv_conv_lstm_cell.1} parent=0 // pred_check_branch
    %13 = sbr.rel (0) target = $region5
  $region4: #{marv_conv_lstm_cell.1} parent=0 // pred_region
    _
  $region5: #{marv_conv_lstm_cell.1} parent=0 // pred_fallthru
    _
  // Predicated region
  $region6: #{marv_conv_lstm_cell.1} parent=0 // pred_check
    _
  $region7: #{marv_conv_lstm_cell.1} parent=0 // pred_check_branch
    %15 = sbr.rel (0) target = $region9
  $region8: #{marv_conv_lstm_cell.1} parent=0 // pred_region
    _
  $region9: #{marv_conv_lstm_cell.1} parent=0 // pred_fallthru
    _
  // Predicated region
  $region10: #{marv_conv_lstm_cell.1} parent=0 // pred_check
    _
  $region11: #{marv_conv_lstm_cell.1} parent=0 // pred_check_branch
    %17 = sbr.rel (0) target = $region13
  $region12: #{marv_conv_lstm_cell.1} parent=0 // pred_region
    _
  $region13: #{marv_conv_lstm_cell.1} parent=0 // pred_fallthru
    _
  // Predicated region
  $region14: #{marv_conv_lstm_cell.1} parent=0 // pred_check
    _
  $region15: #{marv_conv_lstm_cell.1} parent=0 // pred_check_branch
    %19 = sbr.rel (0) target = $region17
  $region16: #{marv_conv_lstm_cell.1} parent=0 // pred_region
    _
  $region17: #{marv_conv_lstm_cell.1} parent=0 // pred_fallthru
    _
  // Predicated region
  $region18: #{marv_conv_lstm_cell.1} parent=0 // pred_check
    _
  $region19: #{marv_conv_lstm_cell.1} parent=0 // pred_check_branch
    %21 = sbr.rel (0) target = $region21
  $region20: #{marv_conv_lstm_cell.1} parent=0 // pred_region
    _
  $region21: #{marv_conv_lstm_cell.1} parent=0 // pred_fallthru
    _
  %v22 = vld [vmem:[%s1] sm:$0xff]
  %v23 = vld [vmem:[%s1 + $0x8] sm:$0xff]
  %v24 = vld [vmem:[%s1 + $0x10] sm:$0xff]
  %v25 = vld [vmem:[%s1 + $0x18] sm:$0xff]
  %v26 = vld [vmem:[%s1 + $0x20] sm:$0xff]
  %v27 = vld [vmem:[%s1 + $0x28] sm:$0xff]
  %v28 = vld [vmem:[%s1 + $0x30] sm:$0xff]
  %v29 = vld [vmem:[%s1 + $0x38] sm:$0xff]
  %v30 = vld [vmem:[%s1 + $0x40] sm:$0xff]
  %v31 = vld [vmem:[%s1 + $0x48] sm:$0xff]
  %v32 = vld [vmem:[%s1 + $0x50] sm:$0xff]
  %v33 = vld [vmem:[%s1 + $0x58] sm:$0xff]
  %v34 = vld [vmem:[%s1 + $0x60] sm:$0xff]
  %v35 = vld [vmem:[%s1 + $0x68] sm:$0xff]
  %v36 = vld [vmem:[%s1 + $0x70] sm:$0xff]
  %v37 = vld [vmem:[%s1 + $0x78] sm:$0xff]
  %v38 = vld [vmem:[%s1 + $0x80] sm:$0xff]
  %v39 = vld [vmem:[%s1 + $0x88] sm:$0xff]
  %v40 = vld [vmem:[%s1 + $0x90] sm:$0xff]
  %v41 = vld [vmem:[%s1 + $0x98] sm:$0xff]
  %v42 = vld [vmem:[%s1 + $0xa0] sm:$0xff]
  %v43 = vld [vmem:[%s1 + $0xa8] sm:$0xff]
  %v44 = vld [vmem:[%s1 + $0xb0] sm:$0xff]
  %v45 = vld [vmem:[%s1 + $0xb8] sm:$0xff]
  %v46 = vld [vmem:[%s1 + $0xc0] sm:$0xff]
  %v47 = vld [vmem:[%s1 + $0xc8] sm:$0xff]
  %v48 = vld [vmem:[%s1 + $0xd0] sm:$0xff]
  %v49 = vld [vmem:[%s1 + $0xd8] sm:$0xff]
  %v50 = vld [vmem:[%s1 + $0xe0] sm:$0xff]
  %v51 = vld [vmem:[%s1 + $0xe8] sm:$0xff]
  %v52 = vld [vmem:[%s1 + $0xf0] sm:$0xff]
  %v53 = vld [vmem:[%s1 + $0xf8] sm:$0xff]
  %v54 = vld [vmem:[%s1 + $0x100] sm:$0xff]
  %v55 = vld [vmem:[%s1 + $0x108] sm:$0xff]
  %v56 = vld [vmem:[%s1 + $0x110] sm:$0xff]
  %v57 = vld [vmem:[%s1 + $0x118] sm:$0xff]
  %v58 = vld [vmem:[%s1 + $0x120] sm:$0xff]
  %v59 = vld [vmem:[%s1 + $0x128] sm:$0xff]
  %v60 = vld [vmem:[%s1 + $0x130] sm:$0xff]
  %v61 = vld [vmem:[%s1 + $0x138] sm:$0xff]
  %v62 = vld [vmem:[%s1 + $0x140] sm:$0xff]
  %v63 = vld [vmem:[%s1 + $0x148] sm:$0xff]
  %v64 = vld [vmem:[%s1 + $0x150] sm:$0xff]
  %v65 = vld [vmem:[%s1 + $0x158] sm:$0xff]
  %v66 = vld [vmem:[%s1 + $0x160] sm:$0xff]
  %v67 = vld [vmem:[%s1 + $0x168] sm:$0xff]
  %v68 = vld [vmem:[%s1 + $0x170] sm:$0xff]
  %v69 = vld [vmem:[%s1 + $0x178] sm:$0xff]
  %v70 = vld [vmem:[%s0] sm:$0xff]
  %v71 = vld [vmem:[%s0 + $0x8] sm:$0xff]
  %v72 = vld [vmem:[%s0 + $0x10] sm:$0xff]
  %v73 = vld [vmem:[%s0 + $0x18] sm:$0xff]
  %v74 = vld [vmem:[%s0 + $0x20] sm:$0xff]
  %v75 = vld [vmem:[%s0 + $0x28] sm:$0xff]
  %v76 = vld [vmem:[%s0 + $0x30] sm:$0xff]
  %v77 = vld [vmem:[%s0 + $0x38] sm:$0xff]
  %v78 = vld [vmem:[%s0 + $0x40] sm:$0xff]
  %v79 = vld [vmem:[%s0 + $0x48] sm:$0xff]
  %v80 = vld [vmem:[%s0 + $0x50] sm:$0xff]
  %v81 = vld [vmem:[%s0 + $0x58] sm:$0xff]
  %v82 = vld [vmem:[%s0 + $0x60] sm:$0xff]
  %v83 = vld [vmem:[%s0 + $0x68] sm:$0xff]
  %v84 = vld [vmem:[%s0 + $0x70] sm:$0xff]
  %v85 = vld [vmem:[%s0 + $0x78] sm:$0xff]
  %v86 = vld [vmem:[%s0 + $0x80] sm:$0xff]
  %v87 = vld [vmem:[%s0 + $0x88] sm:$0xff]
  %v88 = vld [vmem:[%s0 + $0x90] sm:$0xff]
  %v89 = vld [vmem:[%s0 + $0x98] sm:$0xff]
  %v90 = vld [vmem:[%s0 + $0xa0] sm:$0xff]
  %v91 = vld [vmem:[%s0 + $0xa8] sm:$0xff]
  %v92 = vld [vmem:[%s0 + $0xb0] sm:$0xff]
  %v93 = vld [vmem:[%s0 + $0xb8] sm:$0xff]
  %v94 = vld [vmem:[%s0 + $0xc0] sm:$0xff]
  %v95 = vld [vmem:[%s0 + $0xc8] sm:$0xff]
  %v96 = vld [vmem:[%s0 + $0xd0] sm:$0xff]
  %v97 = vld [vmem:[%s0 + $0xd8] sm:$0xff]
  %v98 = vld [vmem:[%s0 + $0xe0] sm:$0xff]
  %v99 = vld [vmem:[%s0 + $0xe8] sm:$0xff]
  %v100 = vld [vmem:[%s0 + $0xf0] sm:$0xff]
  %v101 = vld [vmem:[%s0 + $0xf8] sm:$0xff]
  %v102 = vld [vmem:[%s0 + $0x100] sm:$0xff]
  %v103 = vld [vmem:[%s0 + $0x108] sm:$0xff]
  %v104 = vld [vmem:[%s0 + $0x110] sm:$0xff]
  %v105 = vld [vmem:[%s0 + $0x118] sm:$0xff]
  %v106 = vld [vmem:[%s0 + $0x120] sm:$0xff]
  %v107 = vld [vmem:[%s0 + $0x128] sm:$0xff]
  %v108 = vld [vmem:[%s0 + $0x130] sm:$0xff]
  %v109 = vld [vmem:[%s0 + $0x138] sm:$0xff]
  %v110 = vld [vmem:[%s0 + $0x140] sm:$0xff]
  %v111 = vld [vmem:[%s0 + $0x148] sm:$0xff]
  %v112 = vld [vmem:[%s0 + $0x150] sm:$0xff]
  %v113 = vld [vmem:[%s0 + $0x158] sm:$0xff]
  %v114 = vld [vmem:[%s0 + $0x160] sm:$0xff]
  %v115 = vld [vmem:[%s0 + $0x168] sm:$0xff]
  %v116 = vld [vmem:[%s0 + $0x170] sm:$0xff]
  %v117 = vld [vmem:[%s0 + $0x178] sm:$0xff]
  %v118 = vld [vmem:[%s0 + $0x180] sm:$0xff]
  %v119 = vld [vmem:[%s0 + $0x188] sm:$0xff]
  %v120 = vld [vmem:[%s0 + $0x190] sm:$0xff]
  %v121 = vld [vmem:[%s0 + $0x198] sm:$0xff]
  %v122 = vld [vmem:[%s0 + $0x1a0] sm:$0xff]
  %v123 = vld [vmem:[%s0 + $0x1a8] sm:$0xff]
  %v124 = vld [vmem:[%s0 + $0x1b0] sm:$0xff]
  %v125 = vld [vmem:[%s0 + $0x1b8] sm:$0xff]
  %v126 = vld [vmem:[%s0 + $0x1c0] sm:$0xff]
  %v127 = vld [vmem:[%s0 + $0x1c8] sm:$0xff]
  %v128 = vld [vmem:[%s0 + $0x1d0] sm:$0xff]
  %v129 = vld [vmem:[%s0 + $0x1d8] sm:$0xff]
  %v130 = vld [vmem:[%s0 + $0x1e0] sm:$0xff]
  %v131 = vld [vmem:[%s0 + $0x1e8] sm:$0xff]
  %v132 = vld [vmem:[%s0 + $0x1f0] sm:$0xff]
  %v133 = vld [vmem:[%s0 + $0x1f8] sm:$0xff]
  %v134 = vld [vmem:[%s0 + $0x200] sm:$0xff]
  %v135 = vld [vmem:[%s0 + $0x208] sm:$0xff]
  %v136 = vld [vmem:[%s0 + $0x210] sm:$0xff]
  %v137 = vld [vmem:[%s0 + $0x218] sm:$0xff]
  %v138 = vld [vmem:[%s0 + $0x220] sm:$0xff]
  %v139 = vld [vmem:[%s0 + $0x228] sm:$0xff]
  %v140 = vld [vmem:[%s0 + $0x230] sm:$0xff]
  %v141 = vld [vmem:[%s0 + $0x238] sm:$0xff]
  %v142 = vld [vmem:[%s0 + $0x240] sm:$0xff]
  %v143 = vld [vmem:[%s0 + $0x248] sm:$0xff]
  %v144 = vld [vmem:[%s0 + $0x250] sm:$0xff]
  %v145 = vld [vmem:[%s0 + $0x258] sm:$0xff]
  %v146 = vld [vmem:[%s0 + $0x260] sm:$0xff]
  %v147 = vld [vmem:[%s0 + $0x268] sm:$0xff]
  %v148 = vld [vmem:[%s0 + $0x270] sm:$0xff]
  %v149 = vld [vmem:[%s0 + $0x278] sm:$0xff]
  %v150 = vld [vmem:[%s0 + $0x280] sm:$0xff]
  %v151 = vld [vmem:[%s0 + $0x288] sm:$0xff]
  %v152 = vld [vmem:[%s0 + $0x290] sm:$0xff]
  %v153 = vld [vmem:[%s0 + $0x298] sm:$0xff]
  %v154 = vld [vmem:[%s0 + $0x2a0] sm:$0xff]
  %v155 = vld [vmem:[%s0 + $0x2a8] sm:$0xff]
  %v156 = vld [vmem:[%s0 + $0x2b0] sm:$0xff]
  %v157 = vld [vmem:[%s0 + $0x2b8] sm:$0xff]
  %v158 = vld [vmem:[%s0 + $0x2c0] sm:$0xff]
  %v159 = vld [vmem:[%s0 + $0x2c8] sm:$0xff]
  %v160 = vld [vmem:[%s0 + $0x2d0] sm:$0xff]
  %v161 = vld [vmem:[%s0 + $0x2d8] sm:$0xff]
  %v162 = vld [vmem:[%s0 + $0x2e0] sm:$0xff]
  %v163 = vld [vmem:[%s0 + $0x2e8] sm:$0xff]
  %v164 = vld [vmem:[%s0 + $0x2f0] sm:$0xff]
  %v165 = vld [vmem:[%s0 + $0x2f8] sm:$0xff]
  %v166 = vld [vmem:[%s0 + $0x300] sm:$0xff]
  %v167 = vld [vmem:[%s0 + $0x308] sm:$0xff]
  %v168 = vld [vmem:[%s0 + $0x310] sm:$0xff]
  %v169 = vld [vmem:[%s0 + $0x318] sm:$0xff]
  %v170 = vld [vmem:[%s0 + $0x320] sm:$0xff]
  %v171 = vld [vmem:[%s0 + $0x328] sm:$0xff]
  %v172 = vld [vmem:[%s0 + $0x330] sm:$0xff]
  %v173 = vld [vmem:[%s0 + $0x338] sm:$0xff]
  %v174 = vld [vmem:[%s0 + $0x340] sm:$0xff]
  %v175 = vld [vmem:[%s0 + $0x348] sm:$0xff]
  %v176 = vld [vmem:[%s0 + $0x350] sm:$0xff]
  %v177 = vld [vmem:[%s0 + $0x358] sm:$0xff]
  %v178 = vld [vmem:[%s0 + $0x360] sm:$0xff]
  %v179 = vld [vmem:[%s0 + $0x368] sm:$0xff]
  %v180 = vld [vmem:[%s0 + $0x370] sm:$0xff]
  %v181 = vld [vmem:[%s0 + $0x378] sm:$0xff]
  %v182 = vld [vmem:[%s0 + $0x380] sm:$0xff]
  %v183 = vld [vmem:[%s0 + $0x388] sm:$0xff]
  %v184 = vld [vmem:[%s0 + $0x390] sm:$0xff]
  %v185 = vld [vmem:[%s0 + $0x398] sm:$0xff]
  %v186 = vld [vmem:[%s0 + $0x3a0] sm:$0xff]
  %v187 = vld [vmem:[%s0 + $0x3a8] sm:$0xff]
  %v188 = vld [vmem:[%s0 + $0x3b0] sm:$0xff]
  %v189 = vld [vmem:[%s0 + $0x3b8] sm:$0xff]
  %v190 = vld [vmem:[%s0 + $0x3c0] sm:$0xff]
  %v191 = vld [vmem:[%s0 + $0x3c8] sm:$0xff]
  %v192 = vld [vmem:[%s0 + $0x3d0] sm:$0xff]
  %v193 = vld [vmem:[%s0 + $0x3d8] sm:$0xff]
  %v194 = vld [vmem:[%s0 + $0x3e0] sm:$0xff]
  %v195 = vld [vmem:[%s0 + $0x3e8] sm:$0xff]
  %v196 = vld [vmem:[%s0 + $0x3f0] sm:$0xff]
  %v197 = vld [vmem:[%s0 + $0x3f8] sm:$0xff]
  %v198 = vld [vmem:[%s0 + $0x400] sm:$0xff]
  %v199 = vld [vmem:[%s0 + $0x408] sm:$0xff]
  %v200 = vld [vmem:[%s0 + $0x410] sm:$0xff]
  %v201 = vld [vmem:[%s0 + $0x418] sm:$0xff]
  %v202 = vld [vmem:[%s0 + $0x420] sm:$0xff]
  %v203 = vld [vmem:[%s0 + $0x428] sm:$0xff]
  %v204 = vld [vmem:[%s0 + $0x430] sm:$0xff]
  %v205 = vld [vmem:[%s0 + $0x438] sm:$0xff]
  %v206 = vld [vmem:[%s0 + $0x440] sm:$0xff]
  %v207 = vld [vmem:[%s0 + $0x448] sm:$0xff]
  %v208 = vld [vmem:[%s0 + $0x450] sm:$0xff]
  %v209 = vld [vmem:[%s0 + $0x458] sm:$0xff]
  %v210 = vld [vmem:[%s0 + $0x460] sm:$0xff]
  %v211 = vld [vmem:[%s0 + $0x468] sm:$0xff]
  %v212 = vld [vmem:[%s0 + $0x470] sm:$0xff]
  %v213 = vld [vmem:[%s0 + $0x478] sm:$0xff]
  %v214 = vld [vmem:[%s0 + $0x480] sm:$0xff]
  %v215 = vld [vmem:[%s0 + $0x488] sm:$0xff]
  %v216 = vld [vmem:[%s0 + $0x490] sm:$0xff]
  %v217 = vld [vmem:[%s0 + $0x498] sm:$0xff]
  %v218 = vld [vmem:[%s0 + $0x4a0] sm:$0xff]
  %v219 = vld [vmem:[%s0 + $0x4a8] sm:$0xff]
  %v220 = vld [vmem:[%s0 + $0x4b0] sm:$0xff]
  %v221 = vld [vmem:[%s0 + $0x4b8] sm:$0xff]
  %v222 = vld [vmem:[%s0 + $0x4c0] sm:$0xff]
  %v223 = vld [vmem:[%s0 + $0x4c8] sm:$0xff]
  %v224 = vld [vmem:[%s0 + $0x4d0] sm:$0xff]
  %v225 = vld [vmem:[%s0 + $0x4d8] sm:$0xff]
  %v226 = vld [vmem:[%s0 + $0x4e0] sm:$0xff]
  %v227 = vld [vmem:[%s0 + $0x4e8] sm:$0xff]
  %v228 = vld [vmem:[%s0 + $0x4f0] sm:$0xff]
  %v229 = vld [vmem:[%s0 + $0x4f8] sm:$0xff]
  %v230 = vld [vmem:[%s0 + $0x500] sm:$0xff]
  %v231 = vld [vmem:[%s0 + $0x508] sm:$0xff]
  %v232 = vld [vmem:[%s0 + $0x510] sm:$0xff]
  %v233 = vld [vmem:[%s0 + $0x518] sm:$0xff]
  %v234 = vld [vmem:[%s0 + $0x520] sm:$0xff]
  %v235 = vld [vmem:[%s0 + $0x528] sm:$0xff]
  %v236 = vld [vmem:[%s0 + $0x530] sm:$0xff]
  %v237 = vld [vmem:[%s0 + $0x538] sm:$0xff]
  %v238 = vld [vmem:[%s0 + $0x540] sm:$0xff]
  %v239 = vld [vmem:[%s0 + $0x548] sm:$0xff]
  %v240 = vld [vmem:[%s0 + $0x550] sm:$0xff]
  %v241 = vld [vmem:[%s0 + $0x558] sm:$0xff]
  %v242 = vld [vmem:[%s0 + $0x560] sm:$0xff]
  %v243 = vld [vmem:[%s0 + $0x568] sm:$0xff]
  %v244 = vld [vmem:[%s0 + $0x570] sm:$0xff]
  %v245 = vld [vmem:[%s0 + $0x578] sm:$0xff]
  %v246 = vld [vmem:[%s0 + $0x580] sm:$0xff]
  %v247 = vld [vmem:[%s0 + $0x588] sm:$0xff]
  %v248 = vld [vmem:[%s0 + $0x590] sm:$0xff]
  %v249 = vld [vmem:[%s0 + $0x598] sm:$0xff]
  %v250 = vld [vmem:[%s0 + $0x5a0] sm:$0xff]
  %v251 = vld [vmem:[%s0 + $0x5a8] sm:$0xff]
  %v252 = vld [vmem:[%s0 + $0x5b0] sm:$0xff]
  %v253 = vld [vmem:[%s0 + $0x5b8] sm:$0xff]
  %v254 = vld [vmem:[%s0 + $0x5c0] sm:$0xff]
  %v255 = vld [vmem:[%s0 + $0x5c8] sm:$0xff]
  %v256 = vld [vmem:[%s0 + $0x5d0] sm:$0xff]
  %v257 = vld [vmem:[%s0 + $0x5d8] sm:$0xff]
  %v258 = vld [vmem:[%s0 + $0x5e0] sm:$0xff]
  %v259 = vld [vmem:[%s0 + $0x5e8] sm:$0xff]
  %v260 = vld [vmem:[%s0 + $0x5f0] sm:$0xff]
  %v261 = vld [vmem:[%s0 + $0x5f8] sm:$0xff]
  %262 = vmatprep.subr.mxu0 %v71
  %263 = vmatpush1.msra.mxu0 %v70
  %264 = vmatprep.subr.mxu0 %v75
  %265 = vmatpush1.msra.mxu0 %v74
  %266 = vmatprep.subr.mxu0 %v79
  %267 = vmatpush1.msra.mxu0 %v78
  %268 = vmatprep.subr.mxu0 %v83
  %269 = vmatpush1.msra.mxu0 %v82
  %270 = vmatprep.subr.mxu0 %v87
  %271 = vmatpush1.msra.mxu0 %v86
  %272 = vmatprep.subr.mxu0 %v91
  %273 = vmatpush1.msra.mxu0 %v90
  %274 = vmatprep.subr.mxu0 %v95
  %275 = vmatpush1.msra.mxu0 %v94
  %276 = vmatprep.subr.mxu0 %v99
  %277 = vmatpush1.msra.mxu0 %v98
  %278 = vmatprep.subr.mxu0 %v103
  %279 = vmatpush1.msra.mxu0 %v102
  %280 = vmatprep.subr.mxu0 %v107
  %281 = vmatpush1.msra.mxu0 %v106
  %282 = vmatprep.subr.mxu0 %v111
  %283 = vmatpush1.msra.mxu0 %v110
  %284 = vmatprep.subr.mxu0 %v115
  %285 = vmatpush1.msra.mxu0 %v114
  %286 = vmatprep.subr.mxu0 %v119
  %287 = vmatpush1.msra.mxu0 %v118
  %288 = vmatprep.subr.mxu0 %v123
  %289 = vmatpush1.msra.mxu0 %v122
  %290 = vmatprep.subr.mxu0 %v127
  %291 = vmatpush1.msra.mxu0 %v126
  %292 = vmatprep.subr.mxu0 %v131
  %293 = vmatpush1.msra.mxu0 %v130
  %294 = vmatprep.subr.mxu0 %v135
  %295 = vmatpush1.msra.mxu0 %v134
  %296 = vmatprep.subr.mxu0 %v139
  %297 = vmatpush1.msra.mxu0 %v138
  %298 = vmatprep.subr.mxu0 %v143
  %299 = vmatpush1.msra.mxu0 %v142
  %300 = vmatprep.subr.mxu0 %v147
  %301 = vmatpush1.msra.mxu0 %v146
  %302 = vmatprep.subr.mxu0 %v151
  %303 = vmatpush1.msra.mxu0 %v150
  %304 = vmatprep.subr.mxu0 %v155
  %305 = vmatpush1.msra.mxu0 %v154
  %306 = vmatprep.subr.mxu0 %v159
  %307 = vmatpush1.msra.mxu0 %v158
  %308 = vmatprep.subr.mxu0 %v163
  %309 = vmatpush1.msra.mxu0 %v162
  %310 = vmatprep.subr.mxu0 %v167
  %311 = vmatpush1.msra.mxu0 %v166
  %312 = vmatprep.subr.mxu0 %v171
  %313 = vmatpush1.msra.mxu0 %v170
  %314 = vmatprep.subr.mxu0 %v175
  %315 = vmatpush1.msra.mxu0 %v174
  %316 = vmatprep.subr.mxu0 %v179
  %317 = vmatpush1.msra.mxu0 %v178
  %318 = vmatprep.subr.mxu0 %v183
  %319 = vmatpush1.msra.mxu0 %v182
  %320 = vmatprep.subr.mxu0 %v187
  %321 = vmatpush1.msra.mxu0 %v186
  %322 = vmatprep.subr.mxu0 %v191
  %323 = vmatpush1.msra.mxu0 %v190
  %324 = vmatprep.subr.mxu0 %v195
  %325 = vmatpush1.msra.mxu0 %v194
  %326 = vmatprep.mubr.f32.mxu0 %v23
  %327 = vmatmul.mubr.f32.gmra.mrb[0].mxu0 %v22
  %v328 = vpop.f32.mrb[0].mxu0
  %v329 = vadd.f32 0.0, %v328
  %v330 = vpop.f32.mrb[0].mxu0
  %v331 = vadd.f32 0.0, %v330
  %332 = vmatprep.mubr.f32.mxu0 %v26
  %333 = vmatmul.mubr.f32.gmra.mrb[0].mxu0 %v25
  %v334 = vpop.f32.mrb[0].mxu0
  %v335 = vadd.f32 0.0, %v334
  %v336 = vpop.f32.mrb[0].mxu0
  %v337 = vadd.f32 0.0, %v336
  %338 = vmatprep.mubr.f32.mxu0 %v29
  %339 = vmatmul.mubr.f32.gmra.mrb[0].mxu0 %v28
  %v340 = vpop.f32.mrb[0].mxu0
  %v341 = vadd.f32 0.0, %v340
  %v342 = vpop.f32.mrb[0].mxu0
  %v343 = vadd.f32 0.0, %v342
  %344 = vmatprep.mubr.f32.mxu0 %v32
  %345 = vmatmul.mubr.f32.gmra.mrb[0].mxu0 %v31
  %v346 = vpop.f32.mrb[0].mxu0
  %v347 = vadd.f32 0.0, %v346
  %v348 = vpop.f32.mrb[0].mxu0
  %v349 = vadd.f32 0.0, %v348
  %350 = vmatprep.mubr.f32.mxu0 %v35
  %351 = vmatmul.mubr.f32.gmra.mrb[0].mxu0 %v34
  %v352 = vpop.f32.mrb[0].mxu0
  %v353 = vadd.f32 0.0, %v352
  %v354 = vpop.f32.mrb[0].mxu0
  %v355 = vadd.f32 0.0, %v354
  %356 = vmatprep.mubr.f32.mxu0 %v38
  %357 = vmatmul.mubr.f32.gmra.mrb[0].mxu0 %v37
  %v358 = vpop.f32.mrb[0].mxu0
  %v359 = vadd.f32 0.0, %v358
  %v360 = vpop.f32.mrb[0].mxu0
  %v361 = vadd.f32 0.0, %v360
  %362 = vmatprep.mubr.f32.mxu0 %v41
  %363 = vmatmul.mubr.f32.gmra.mrb[0].mxu0 %v40
  %v364 = vpop.f32.mrb[0].mxu0
  %v365 = vadd.f32 0.0, %v364
  %v366 = vpop.f32.mrb[0].mxu0
  %v367 = vadd.f32 0.0, %v366
  %368 = vmatprep.mubr.f32.mxu0 %v44
  %369 = vmatmul.mubr.f32.gmra.mrb[0].mxu0 %v43
  %v370 = vpop.f32.mrb[0].mxu0
  %v371 = vadd.f32 0.0, %v370
  %v372 = vpop.f32.mrb[0].mxu0
  %v373 = vadd.f32 0.0, %v372
  %374 = vmatprep.mubr.f32.mxu0 %v47
  %375 = vmatmul.mubr.f32.gmra.mrb[0].mxu0 %v46
  %v376 = vpop.f32.mrb[0].mxu0
  %v377 = vadd.f32 0.0, %v376
  %v378 = vpop.f32.mrb[0].mxu0
  %v379 = vadd.f32 0.0, %v378
  %380 = vmatprep.mubr.f32.mxu0 %v50
  %381 = vmatmul.mubr.f32.gmra.mrb[0].mxu0 %v49
  %v382 = vpop.f32.mrb[0].mxu0
  %v383 = vadd.f32 0.0, %v382
  %v384 = vpop.f32.mrb[0].mxu0
  %v385 = vadd.f32 0.0, %v384
  %386 = vmatprep.mubr.f32.mxu0 %v53
  %387 = vmatmul.mubr.f32.gmra.mrb[0].mxu0 %v52
  %v388 = vpop.f32.mrb[0].mxu0
  %v389 = vadd.f32 0.0, %v388
  %v390 = vpop.f32.mrb[0].mxu0
  %v391 = vadd.f32 0.0, %v390
  %392 = vmatprep.mubr.f32.mxu0 %v56
  %393 = vmatmul.mubr.f32.gmra.mrb[0].mxu0 %v55
  %v394 = vpop.f32.mrb[0].mxu0
  %v395 = vadd.f32 0.0, %v394
  %v396 = vpop.f32.mrb[0].mxu0
  %v397 = vadd.f32 0.0, %v396
  %398 = vmatprep.mubr.f32.mxu0 %v59
  %399 = vmatmul.mubr.f32.gmra.mrb[0].mxu0 %v58
  %v400 = vpop.f32.mrb[0].mxu0
  %v401 = vadd.f32 0.0, %v400
  %v402 = vpop.f32.mrb[0].mxu0
  %v403 = vadd.f32 0.0, %v402
  %404 = vmatprep.mubr.f32.mxu0 %v62
  %405 = vmatmul.mubr.f32.gmra.mrb[0].mxu0 %v61
  %v406 = vpop.f32.mrb[0].mxu0
  %v407 = vadd.f32 0.0, %v406
  %v408 = vpop.f32.mrb[0].mxu0
  %v409 = vadd.f32 0.0, %v408
  %410 = vmatprep.mubr.f32.mxu0 %v65
  %411 = vmatmul.mubr.f32.gmra.mrb[0].mxu0 %v64
  %v412 = vpop.f32.mrb[0].mxu0
  %v413 = vadd.f32 0.0, %v412
  %v414 = vpop.f32.mrb[0].mxu0
  %v415 = vadd.f32 0.0, %v414
  %416 = vmatprep.mubr.f32.mxu0 %v68
  %417 = vmatmul.mubr.f32.gmra.mrb[0].mxu0 %v67
  %v418 = vpop.f32.mrb[0].mxu0
  %v419 = vadd.f32 0.0, %v418
  %v420 = vpop.f32.mrb[0].mxu0
  %v421 = vadd.f32 0.0, %v420
  %422 = vdwg.mxu0
  %423 = vmatprep.subr.mxu0 %v199
  %424 = vmatpush1.msra.mxu0 %v198
  %425 = vmatprep.subr.mxu0 %v203
  %426 = vmatpush1.msra.mxu0 %v202
  %427 = vmatprep.subr.mxu0 %v207
  %428 = vmatpush1.msra.mxu0 %v206
  %429 = vmatprep.subr.mxu0 %v211
  %430 = vmatpush1.msra.mxu0 %v210
  %431 = vmatprep.subr.mxu0 %v215
  %432 = vmatpush1.msra.mxu0 %v214
  %433 = vmatprep.subr.mxu0 %v219
  %434 = vmatpush1.msra.mxu0 %v218
  %435 = vmatprep.subr.mxu0 %v223
  %436 = vmatpush1.msra.mxu0 %v222
  %437 = vmatprep.subr.mxu0 %v227
  %438 = vmatpush1.msra.mxu0 %v226
  %439 = vmatprep.subr.mxu0 %v231
  %440 = vmatpush1.msra.mxu0 %v230
  %441 = vmatprep.subr.mxu0 %v235
  %442 = vmatpush1.msra.mxu0 %v234
  %443 = vmatprep.subr.mxu0 %v239
  %444 = vmatpush1.msra.mxu0 %v238
  %445 = vmatprep.subr.mxu0 %v243
  %446 = vmatpush1.msra.mxu0 %v242
  %447 = vmatprep.subr.mxu0 %v247
  %448 = vmatpush1.msra.mxu0 %v246
  %449 = vmatprep.subr.mxu0 %v251
  %450 = vmatpush1.msra.mxu0 %v250
  %451 = vmatprep.subr.mxu0 %v255
  %452 = vmatpush1.msra.mxu0 %v254
  %453 = vmatprep.subr.mxu0 %v259
  %454 = vmatpush1.msra.mxu0 %v258
  %455 = vmatprep.subr.mxu0 0.0
  %456 = vmatpush1.msra.mxu0 0.0
  %457 = vmatprep.subr.mxu0 0.0
  %458 = vmatpush1.msra.mxu0 0.0
  %459 = vmatprep.subr.mxu0 0.0
  %460 = vmatpush1.msra.mxu0 0.0
  %461 = vmatprep.subr.mxu0 0.0
  %462 = vmatpush1.msra.mxu0 0.0
  %463 = vmatprep.subr.mxu0 0.0
  %464 = vmatpush1.msra.mxu0 0.0
  %465 = vmatprep.subr.mxu0 0.0
  %466 = vmatpush1.msra.mxu0 0.0
  %467 = vmatprep.subr.mxu0 0.0
  %468 = vmatpush1.msra.mxu0 0.0
  %469 = vmatprep.subr.mxu0 0.0
  %470 = vmatpush1.msra.mxu0 0.0
  %471 = vmatprep.subr.mxu0 0.0
  %472 = vmatpush1.msra.mxu0 0.0
  %473 = vmatprep.subr.mxu0 0.0
  %474 = vmatpush1.msra.mxu0 0.0
  %475 = vmatprep.subr.mxu0 0.0
  %476 = vmatpush1.msra.mxu0 0.0
  %477 = vmatprep.subr.mxu0 0.0
  %478 = vmatpush1.msra.mxu0 0.0
  %479 = vmatprep.subr.mxu0 0.0
  %480 = vmatpush1.msra.mxu0 0.0
  %481 = vmatprep.subr.mxu0 0.0
  %482 = vmatpush1.msra.mxu0 0.0
  %483 = vmatprep.subr.mxu0 0.0
  %484 = vmatpush1.msra.mxu0 0.0
  %485 = vmatprep.subr.mxu0 0.0
  %486 = vmatpush1.msra.mxu0 0.0
  %487 = vmatprep.mubr.f32.mxu0 0.0
  %488 = vmatmul.mubr.f32.gmra.mrb[0].mxu0 %v24
  %v489 = vpop.f32.mrb[0].mxu0
  %v490 = vadd.f32 %v329, %v489
  %v491 = vpop.f32.mrb[0].mxu0
  %v492 = vadd.f32 %v331, %v491
  %493 = vmatprep.mubr.f32.mxu0 0.0
  %494 = vmatmul.mubr.f32.gmra.mrb[0].mxu0 %v27
  %v495 = vpop.f32.mrb[0].mxu0
  %v496 = vadd.f32 %v335, %v495
  %v497 = vpop.f32.mrb[0].mxu0
  %v498 = vadd.f32 %v337, %v497
  %499 = vmatprep.mubr.f32.mxu0 0.0
  %500 = vmatmul.mubr.f32.gmra.mrb[0].mxu0 %v30
  %v501 = vpop.f32.mrb[0].mxu0
  %v502 = vadd.f32 %v341, %v501
  %v503 = vpop.f32.mrb[0].mxu0
  %v504 = vadd.f32 %v343, %v503
  %505 = vmatprep.mubr.f32.mxu0 0.0
  %506 = vmatmul.mubr.f32.gmra.mrb[0].mxu0 %v33
  %v507 = vpop.f32.mrb[0].mxu0
  %v508 = vadd.f32 %v347, %v507
  %v509 = vpop.f32.mrb[0].mxu0
  %v510 = vadd.f32 %v349, %v509
  %511 = vmatprep.mubr.f32.mxu0 0.0
  %512 = vmatmul.mubr.f32.gmra.mrb[0].mxu0 %v36
  %v513 = vpop.f32.mrb[0].mxu0
  %v514 = vadd.f32 %v353, %v513
  %v515 = vpop.f32.mrb[0].mxu0
  %v516 = vadd.f32 %v355, %v515
  %517 = vmatprep.mubr.f32.mxu0 0.0
  %518 = vmatmul.mubr.f32.gmra.mrb[0].mxu0 %v39
  %v519 = vpop.f32.mrb[0].mxu0
  %v520 = vadd.f32 %v359, %v519
  %v521 = vpop.f32.mrb[0].mxu0
  %v522 = vadd.f32 %v361, %v521
  %523 = vmatprep.mubr.f32.mxu0 0.0
  %524 = vmatmul.mubr.f32.gmra.mrb[0].mxu0 %v42
  %v525 = vpop.f32.mrb[0].mxu0
  %v526 = vadd.f32 %v365, %v525
  %v527 = vpop.f32.mrb[0].mxu0
  %v528 = vadd.f32 %v367, %v527
  %529 = vmatprep.mubr.f32.mxu0 0.0
  %530 = vmatmul.mubr.f32.gmra.mrb[0].mxu0 %v45
  %v531 = vpop.f32.mrb[0].mxu0
  %v532 = vadd.f32 %v371, %v531
  %v533 = vpop.f32.mrb[0].mxu0
  %v534 = vadd.f32 %v373, %v533
  %535 = vmatprep.mubr.f32.mxu0 0.0
  %536 = vmatmul.mubr.f32.gmra.mrb[0].mxu0 %v48
  %v537 = vpop.f32.mrb[0].mxu0
  %v538 = vadd.f32 %v377, %v537
  %v539 = vpop.f32.mrb[0].mxu0
  %v540 = vadd.f32 %v379, %v539
  %541 = vmatprep.mubr.f32.mxu0 0.0
  %542 = vmatmul.mubr.f32.gmra.mrb[0].mxu0 %v51
  %v543 = vpop.f32.mrb[0].mxu0
  %v544 = vadd.f32 %v383, %v543
  %v545 = vpop.f32.mrb[0].mxu0
  %v546 = vadd.f32 %v385, %v545
  %547 = vmatprep.mubr.f32.mxu0 0.0
  %548 = vmatmul.mubr.f32.gmra.mrb[0].mxu0 %v54
  %v549 = vpop.f32.mrb[0].mxu0
  %v550 = vadd.f32 %v389, %v549
  %v551 = vpop.f32.mrb[0].mxu0
  %v552 = vadd.f32 %v391, %v551
  %553 = vmatprep.mubr.f32.mxu0 0.0
  %554 = vmatmul.mubr.f32.gmra.mrb[0].mxu0 %v57
  %v555 = vpop.f32.mrb[0].mxu0
  %v556 = vadd.f32 %v395, %v555
  %v557 = vpop.f32.mrb[0].mxu0
  %v558 = vadd.f32 %v397, %v557
  %559 = vmatprep.mubr.f32.mxu0 0.0
  %560 = vmatmul.mubr.f32.gmra.mrb[0].mxu0 %v60
  %v561 = vpop.f32.mrb[0].mxu0
  %v562 = vadd.f32 %v401, %v561
  %v563 = vpop.f32.mrb[0].mxu0
  %v564 = vadd.f32 %v403, %v563
  %565 = vmatprep.mubr.f32.mxu0 0.0
  %566 = vmatmul.mubr.f32.gmra.mrb[0].mxu0 %v63
  %v567 = vpop.f32.mrb[0].mxu0
  %v568 = vadd.f32 %v407, %v567
  %v569 = vpop.f32.mrb[0].mxu0
  %v570 = vadd.f32 %v409, %v569
  %571 = vmatprep.mubr.f32.mxu0 0.0
  %572 = vmatmul.mubr.f32.gmra.mrb[0].mxu0 %v66
  %v573 = vpop.f32.mrb[0].mxu0
  %v574 = vadd.f32 %v413, %v573
  %v575 = vpop.f32.mrb[0].mxu0
  %v576 = vadd.f32 %v415, %v575
  %577 = vmatprep.mubr.f32.mxu0 0.0
  %578 = vmatmul.mubr.f32.gmra.mrb[0].mxu0 %v69
  %v579 = vpop.f32.mrb[0].mxu0
  %v580 = vadd.f32 %v419, %v579
  %v581 = vpop.f32.mrb[0].mxu0
  %v582 = vadd.f32 %v421, %v581
  %583 = vdwg.mxu0
  %584 = vmatprep.subr.mxu0 %v73
  %585 = vmatpush1.msra.mxu0 %v72
  %586 = vmatprep.subr.mxu0 %v77
  %587 = vmatpush1.msra.mxu0 %v76
  %588 = vmatprep.subr.mxu0 %v81
  %589 = vmatpush1.msra.mxu0 %v80
  %590 = vmatprep.subr.mxu0 %v85
  %591 = vmatpush1.msra.mxu0 %v84
  %592 = vmatprep.subr.mxu0 %v89
  %593 = vmatpush1.msra.mxu0 %v88
  %594 = vmatprep.subr.mxu0 %v93
  %595 = vmatpush1.msra.mxu0 %v92
  %596 = vmatprep.subr.mxu0 %v97
  %597 = vmatpush1.msra.mxu0 %v96
  %598 = vmatprep.subr.mxu0 %v101
  %599 = vmatpush1.msra.mxu0 %v100
  %600 = vmatprep.subr.mxu0 %v105
  %601 = vmatpush1.msra.mxu0 %v104
  %602 = vmatprep.subr.mxu0 %v109
  %603 = vmatpush1.msra.mxu0 %v108
  %604 = vmatprep.subr.mxu0 %v113
  %605 = vmatpush1.msra.mxu0 %v112
  %606 = vmatprep.subr.mxu0 %v117
  %607 = vmatpush1.msra.mxu0 %v116
  %608 = vmatprep.subr.mxu0 %v121
  %609 = vmatpush1.msra.mxu0 %v120
  %610 = vmatprep.subr.mxu0 %v125
  %611 = vmatpush1.msra.mxu0 %v124
  %612 = vmatprep.subr.mxu0 %v129
  %613 = vmatpush1.msra.mxu0 %v128
  %614 = vmatprep.subr.mxu0 %v133
  %615 = vmatpush1.msra.mxu0 %v132
  %616 = vmatprep.subr.mxu0 %v137
  %617 = vmatpush1.msra.mxu0 %v136
  %618 = vmatprep.subr.mxu0 %v141
  %619 = vmatpush1.msra.mxu0 %v140
  %620 = vmatprep.subr.mxu0 %v145
  %621 = vmatpush1.msra.mxu0 %v144
  %622 = vmatprep.subr.mxu0 %v149
  %623 = vmatpush1.msra.mxu0 %v148
  %624 = vmatprep.subr.mxu0 %v153
  %625 = vmatpush1.msra.mxu0 %v152
  %626 = vmatprep.subr.mxu0 %v157
  %627 = vmatpush1.msra.mxu0 %v156
  %628 = vmatprep.subr.mxu0 %v161
  %629 = vmatpush1.msra.mxu0 %v160
  %630 = vmatprep.subr.mxu0 %v165
  %631 = vmatpush1.msra.mxu0 %v164
  %632 = vmatprep.subr.mxu0 %v169
  %633 = vmatpush1.msra.mxu0 %v168
  %634 = vmatprep.subr.mxu0 %v173
  %635 = vmatpush1.msra.mxu0 %v172
  %636 = vmatprep.subr.mxu0 %v177
  %637 = vmatpush1.msra.mxu0 %v176
  %638 = vmatprep.subr.mxu0 %v181
  %639 = vmatpush1.msra.mxu0 %v180
  %640 = vmatprep.subr.mxu0 %v185
  %641 = vmatpush1.msra.mxu0 %v184
  %642 = vmatprep.subr.mxu0 %v189
  %643 = vmatpush1.msra.mxu0 %v188
  %644 = vmatprep.subr.mxu0 %v193
  %645 = vmatpush1.msra.mxu0 %v192
  %646 = vmatprep.subr.mxu0 %v197
  %647 = vmatpush1.msra.mxu0 %v196
  %648 = vmatprep.mubr.f32.mxu0 %v23
  %649 = vmatmul.mubr.f32.gmra.mrb[0].mxu0 %v22
  %v650 = vpop.f32.mrb[0].mxu0
  %v651 = vadd.f32 0.0, %v650
  %v652 = vpop.f32.mrb[0].mxu0
  %v653 = vadd.f32 0.0, %v652
  %654 = vmatprep.mubr.f32.mxu0 %v26
  %655 = vmatmul.mubr.f32.gmra.mrb[0].mxu0 %v25
  %v656 = vpop.f32.mrb[0].mxu0
  %v657 = vadd.f32 0.0, %v656
  %v658 = vpop.f32.mrb[0].mxu0
  %v659 = vadd.f32 0.0, %v658
  %660 = vmatprep.mubr.f32.mxu0 %v29
  %661 = vmatmul.mubr.f32.gmra.mrb[0].mxu0 %v28
  %v662 = vpop.f32.mrb[0].mxu0
  %v663 = vadd.f32 0.0, %v662
  %v664 = vpop.f32.mrb[0].mxu0
  %v665 = vadd.f32 0.0, %v664
  %666 = vmatprep.mubr.f32.mxu0 %v32
  %667 = vmatmul.mubr.f32.gmra.mrb[0].mxu0 %v31
  %v668 = vpop.f32.mrb[0].mxu0
  %v669 = vadd.f32 0.0, %v668
  %v670 = vpop.f32.mrb[0].mxu0
  %v671 = vadd.f32 0.0, %v670
  %672 = vmatprep.mubr.f32.mxu0 %v35
  %673 = vmatmul.mubr.f32.gmra.mrb[0].mxu0 %v34
  %v674 = vpop.f32.mrb[0].mxu0
  %v675 = vadd.f32 0.0, %v674
  %v676 = vpop.f32.mrb[0].mxu0
  %v677 = vadd.f32 0.0, %v676
  %678 = vmatprep.mubr.f32.mxu0 %v38
  %679 = vmatmul.mubr.f32.gmra.mrb[0].mxu0 %v37
  %v680 = vpop.f32.mrb[0].mxu0
  %v681 = vadd.f32 0.0, %v680
  %v682 = vpop.f32.mrb[0].mxu0
  %v683 = vadd.f32 0.0, %v682
  %684 = vmatprep.mubr.f32.mxu0 %v41
  %685 = vmatmul.mubr.f32.gmra.mrb[0].mxu0 %v40
  %v686 = vpop.f32.mrb[0].mxu0
  %v687 = vadd.f32 0.0, %v686
  %v688 = vpop.f32.mrb[0].mxu0
  %v689 = vadd.f32 0.0, %v688
  %690 = vmatprep.mubr.f32.mxu0 %v44
  %691 = vmatmul.mubr.f32.gmra.mrb[0].mxu0 %v43
  %v692 = vpop.f32.mrb[0].mxu0
  %v693 = vadd.f32 0.0, %v692
  %v694 = vpop.f32.mrb[0].mxu0
  %v695 = vadd.f32 0.0, %v694
  %696 = vmatprep.mubr.f32.mxu0 %v47
  %697 = vmatmul.mubr.f32.gmra.mrb[0].mxu0 %v46
  %v698 = vpop.f32.mrb[0].mxu0
  %v699 = vadd.f32 0.0, %v698
  %v700 = vpop.f32.mrb[0].mxu0
  %v701 = vadd.f32 0.0, %v700
  %702 = vmatprep.mubr.f32.mxu0 %v50
  %703 = vmatmul.mubr.f32.gmra.mrb[0].mxu0 %v49
  %v704 = vpop.f32.mrb[0].mxu0
  %v705 = vadd.f32 0.0, %v704
  %v706 = vpop.f32.mrb[0].mxu0
  %v707 = vadd.f32 0.0, %v706
  %708 = vmatprep.mubr.f32.mxu0 %v53
  %709 = vmatmul.mubr.f32.gmra.mrb[0].mxu0 %v52
  %v710 = vpop.f32.mrb[0].mxu0
  %v711 = vadd.f32 0.0, %v710
  %v712 = vpop.f32.mrb[0].mxu0
  %v713 = vadd.f32 0.0, %v712
  %714 = vmatprep.mubr.f32.mxu0 %v56
  %715 = vmatmul.mubr.f32.gmra.mrb[0].mxu0 %v55
  %v716 = vpop.f32.mrb[0].mxu0
  %v717 = vadd.f32 0.0, %v716
  %v718 = vpop.f32.mrb[0].mxu0
  %v719 = vadd.f32 0.0, %v718
  %720 = vmatprep.mubr.f32.mxu0 %v59
  %721 = vmatmul.mubr.f32.gmra.mrb[0].mxu0 %v58
  %v722 = vpop.f32.mrb[0].mxu0
  %v723 = vadd.f32 0.0, %v722
  %v724 = vpop.f32.mrb[0].mxu0
  %v725 = vadd.f32 0.0, %v724
  %726 = vmatprep.mubr.f32.mxu0 %v62
  %727 = vmatmul.mubr.f32.gmra.mrb[0].mxu0 %v61
  %v728 = vpop.f32.mrb[0].mxu0
  %v729 = vadd.f32 0.0, %v728
  %v730 = vpop.f32.mrb[0].mxu0
  %v731 = vadd.f32 0.0, %v730
  %732 = vmatprep.mubr.f32.mxu0 %v65
  %733 = vmatmul.mubr.f32.gmra.mrb[0].mxu0 %v64
  %v734 = vpop.f32.mrb[0].mxu0
  %v735 = vadd.f32 0.0, %v734
  %v736 = vpop.f32.mrb[0].mxu0
  %v737 = vadd.f32 0.0, %v736
  %738 = vmatprep.mubr.f32.mxu0 %v68
  %739 = vmatmul.mubr.f32.gmra.mrb[0].mxu0 %v67
  %v740 = vpop.f32.mrb[0].mxu0
  %v741 = vadd.f32 0.0, %v740
  %v742 = vpop.f32.mrb[0].mxu0
  %v743 = vadd.f32 0.0, %v742
  %744 = vdwg.mxu0
  %745 = vmatprep.subr.mxu0 %v201
  %746 = vmatpush1.msra.mxu0 %v200
  %747 = vmatprep.subr.mxu0 %v205
  %748 = vmatpush1.msra.mxu0 %v204
  %749 = vmatprep.subr.mxu0 %v209
  %750 = vmatpush1.msra.mxu0 %v208
  %751 = vmatprep.subr.mxu0 %v213
  %752 = vmatpush1.msra.mxu0 %v212
  %753 = vmatprep.subr.mxu0 %v217
  %754 = vmatpush1.msra.mxu0 %v216
  %755 = vmatprep.subr.mxu0 %v221
  %756 = vmatpush1.msra.mxu0 %v220
  %757 = vmatprep.subr.mxu0 %v225
  %758 = vmatpush1.msra.mxu0 %v224
  %759 = vmatprep.subr.mxu0 %v229
  %760 = vmatpush1.msra.mxu0 %v228
  %761 = vmatprep.subr.mxu0 %v233
  %762 = vmatpush1.msra.mxu0 %v232
  %763 = vmatprep.subr.mxu0 %v237
  %764 = vmatpush1.msra.mxu0 %v236
  %765 = vmatprep.subr.mxu0 %v241
  %766 = vmatpush1.msra.mxu0 %v240
  %767 = vmatprep.subr.mxu0 %v245
  %768 = vmatpush1.msra.mxu0 %v244
  %769 = vmatprep.subr.mxu0 %v249
  %770 = vmatpush1.msra.mxu0 %v248
  %771 = vmatprep.subr.mxu0 %v253
  %772 = vmatpush1.msra.mxu0 %v252
  %773 = vmatprep.subr.mxu0 %v257
  %774 = vmatpush1.msra.mxu0 %v256
  %775 = vmatprep.subr.mxu0 %v261
  %776 = vmatpush1.msra.mxu0 %v260
  %777 = vmatprep.subr.mxu0 0.0
  %778 = vmatpush1.msra.mxu0 0.0
  %779 = vmatprep.subr.mxu0 0.0
  %780 = vmatpush1.msra.mxu0 0.0
  %781 = vmatprep.subr.mxu0 0.0
  %782 = vmatpush1.msra.mxu0 0.0
  %783 = vmatprep.subr.mxu0 0.0
  %784 = vmatpush1.msra.mxu0 0.0
  %785 = vmatprep.subr.mxu0 0.0
  %786 = vmatpush1.msra.mxu0 0.0
  %787 = vmatprep.subr.mxu0 0.0
  %788 = vmatpush1.msra.mxu0 0.0
  %789 = vmatprep.subr.mxu0 0.0
  %790 = vmatpush1.msra.mxu0 0.0
  %791 = vmatprep.subr.mxu0 0.0
  %792 = vmatpush1.msra.mxu0 0.0
  %793 = vmatprep.subr.mxu0 0.0
  %794 = vmatpush1.msra.mxu0 0.0
  %795 = vmatprep.subr.mxu0 0.0
  %796 = vmatpush1.msra.mxu0 0.0
  %797 = vmatprep.subr.mxu0 0.0
  %798 = vmatpush1.msra.mxu0 0.0
  %799 = vmatprep.subr.mxu0 0.0
  %800 = vmatpush1.msra.mxu0 0.0
  %801 = vmatprep.subr.mxu0 0.0
  %802 = vmatpush1.msra.mxu0 0.0
  %803 = vmatprep.subr.mxu0 0.0
  %804 = vmatpush1.msra.mxu0 0.0
  %805 = vmatprep.subr.mxu0 0.0
  %806 = vmatpush1.msra.mxu0 0.0
  %807 = vmatprep.subr.mxu0 0.0
  %808 = vmatpush1.msra.mxu0 0.0
  %809 = vmatprep.mubr.f32.mxu0 0.0
  %810 = vmatmul.mubr.f32.gmra.mrb[0].mxu0 %v24
  %v811 = vpop.f32.mrb[0].mxu0
  %v812 = vadd.f32 %v651, %v811
  %v813 = vpop.f32.mrb[0].mxu0
  %v814 = vadd.f32 %v653, %v813
  %815 = vmatprep.mubr.f32.mxu0 0.0
  %816 = vmatmul.mubr.f32.gmra.mrb[0].mxu0 %v27
  %v817 = vpop.f32.mrb[0].mxu0
  %v818 = vadd.f32 %v657, %v817
  %v819 = vpop.f32.mrb[0].mxu0
  %v820 = vadd.f32 %v659, %v819
  %821 = vmatprep.mubr.f32.mxu0 0.0
  %822 = vmatmul.mubr.f32.gmra.mrb[0].mxu0 %v30
  %v823 = vpop.f32.mrb[0].mxu0
  %v824 = vadd.f32 %v663, %v823
  %v825 = vpop.f32.mrb[0].mxu0
  %v826 = vadd.f32 %v665, %v825
  %827 = vmatprep.mubr.f32.mxu0 0.0
  %828 = vmatmul.mubr.f32.gmra.mrb[0].mxu0 %v33
  %v829 = vpop.f32.mrb[0].mxu0
  %v830 = vadd.f32 %v669, %v829
  %v831 = vpop.f32.mrb[0].mxu0
  %v832 = vadd.f32 %v671, %v831
  %833 = vmatprep.mubr.f32.mxu0 0.0
  %834 = vmatmul.mubr.f32.gmra.mrb[0].mxu0 %v36
  %v835 = vpop.f32.mrb[0].mxu0
  %v836 = vadd.f32 %v675, %v835
  %v837 = vpop.f32.mrb[0].mxu0
  %v838 = vadd.f32 %v677, %v837
  %839 = vmatprep.mubr.f32.mxu0 0.0
  %840 = vmatmul.mubr.f32.gmra.mrb[0].mxu0 %v39
  %v841 = vpop.f32.mrb[0].mxu0
  %v842 = vadd.f32 %v681, %v841
  %v843 = vpop.f32.mrb[0].mxu0
  %v844 = vadd.f32 %v683, %v843
  %845 = vmatprep.mubr.f32.mxu0 0.0
  %846 = vmatmul.mubr.f32.gmra.mrb[0].mxu0 %v42
  %v847 = vpop.f32.mrb[0].mxu0
  %v848 = vadd.f32 %v687, %v847
  %v849 = vpop.f32.mrb[0].mxu0
  %v850 = vadd.f32 %v689, %v849
  %851 = vmatprep.mubr.f32.mxu0 0.0
  %852 = vmatmul.mubr.f32.gmra.mrb[0].mxu0 %v45
  %v853 = vpop.f32.mrb[0].mxu0
  %v854 = vadd.f32 %v693, %v853
  %v855 = vpop.f32.mrb[0].mxu0
  %v856 = vadd.f32 %v695, %v855
  %857 = vmatprep.mubr.f32.mxu0 0.0
  %858 = vmatmul.mubr.f32.gmra.mrb[0].mxu0 %v48
  %v859 = vpop.f32.mrb[0].mxu0
  %v860 = vadd.f32 %v699, %v859
  %v861 = vpop.f32.mrb[0].mxu0
  %v862 = vadd.f32 %v701, %v861
  %863 = vmatprep.mubr.f32.mxu0 0.0
  %864 = vmatmul.mubr.f32.gmra.mrb[0].mxu0 %v51
  %v865 = vpop.f32.mrb[0].mxu0
  %v866 = vadd.f32 %v705, %v865
  %v867 = vpop.f32.mrb[0].mxu0
  %v868 = vadd.f32 %v707, %v867
  %869 = vmatprep.mubr.f32.mxu0 0.0
  %870 = vmatmul.mubr.f32.gmra.mrb[0].mxu0 %v54
  %v871 = vpop.f32.mrb[0].mxu0
  %v872 = vadd.f32 %v711, %v871
  %v873 = vpop.f32.mrb[0].mxu0
  %v874 = vadd.f32 %v713, %v873
  %875 = vmatprep.mubr.f32.mxu0 0.0
  %876 = vmatmul.mubr.f32.gmra.mrb[0].mxu0 %v57
  %v877 = vpop.f32.mrb[0].mxu0
  %v878 = vadd.f32 %v717, %v877
  %v879 = vpop.f32.mrb[0].mxu0
  %v880 = vadd.f32 %v719, %v879
  %881 = vmatprep.mubr.f32.mxu0 0.0
  %882 = vmatmul.mubr.f32.gmra.mrb[0].mxu0 %v60
  %v883 = vpop.f32.mrb[0].mxu0
  %v884 = vadd.f32 %v723, %v883
  %v885 = vpop.f32.mrb[0].mxu0
  %v886 = vadd.f32 %v725, %v885
  %887 = vmatprep.mubr.f32.mxu0 0.0
  %888 = vmatmul.mubr.f32.gmra.mrb[0].mxu0 %v63
  %v889 = vpop.f32.mrb[0].mxu0
  %v890 = vadd.f32 %v729, %v889
  %v891 = vpop.f32.mrb[0].mxu0
  %v892 = vadd.f32 %v731, %v891
  %893 = vmatprep.mubr.f32.mxu0 0.0
  %894 = vmatmul.mubr.f32.gmra.mrb[0].mxu0 %v66
  %v895 = vpop.f32.mrb[0].mxu0
  %v896 = vadd.f32 %v735, %v895
  %v897 = vpop.f32.mrb[0].mxu0
  %v898 = vadd.f32 %v737, %v897
  %899 = vmatprep.mubr.f32.mxu0 0.0
  %900 = vmatmul.mubr.f32.gmra.mrb[0].mxu0 %v69
  %v901 = vpop.f32.mrb[0].mxu0
  %v902 = vadd.f32 %v741, %v901
  %v903 = vpop.f32.mrb[0].mxu0
  %v904 = vadd.f32 %v743, %v903
  %905 = vdwg.mxu0
  %v906 = vld [vmem:[%s2] sm:$0xff]
  %v907 = vld [vmem:[%s2 + $0x8] sm:$0xff]
  %v908 = vld [vmem:[%s2 + $0x10] sm:$0xff]
  %v909 = vld [vmem:[%s2 + $0x18] sm:$0xff]
  %v910 = vld [vmem:[%s2 + $0x20] sm:$0xff]
  %v911 = vld [vmem:[%s2 + $0x28] sm:$0xff]
  %v912 = vld [vmem:[%s2 + $0x30] sm:$0xff]
  %v913 = vld [vmem:[%s2 + $0x38] sm:$0xff]
  %v914 = vld [vmem:[%s2 + $0x40] sm:$0xff]
  %v915 = vld [vmem:[%s2 + $0x48] sm:$0xff]
  %v916 = vld [vmem:[%s2 + $0x50] sm:$0xff]
  %v917 = vld [vmem:[%s2 + $0x58] sm:$0xff]
  %v918 = vld [vmem:[%s2 + $0x60] sm:$0xff]
  %v919 = vld [vmem:[%s2 + $0x68] sm:$0xff]
  %v920 = vld [vmem:[%s2 + $0x70] sm:$0xff]
  %v921 = vld [vmem:[%s2 + $0x78] sm:$0xff]
  %v922 = vld [vmem:[%s3] sm:$0xf]
  %v923 = vld [vmem:[%s4] sm:$0xf]
  %v925 = vlaneseq
  %v926 = vshrl.u32 %v925, 7
  %v927 = vsub.s32 0, %v926
  %v928 = vrot.slane %v922, %v927
  %v929 = vlaneseq
  %v930 = vshrl.u32 %v929, 7
  %v931 = vsub.s32 1, %v930
  %v932 = vrot.slane %v922, %v931
  %v933 = vlaneseq
  %v934 = vshrl.u32 %v933, 7
  %v935 = vsub.s32 2, %v934
  %v936 = vrot.slane %v922, %v935
  %v937 = vlaneseq
  %v938 = vshrl.u32 %v937, 7
  %v939 = vsub.s32 3, %v938
  %v940 = vrot.slane %v922, %v939
  %v945 = vmul.f32 %v906, %v928
  %v946 = vmul.f32 %v907, %v932
  %v947 = vmul.f32 %v908, %v936
  %v948 = vmul.f32 %v909, %v940
  %v949 = vmul.f32 %v910, %v928
  %v950 = vmul.f32 %v911, %v932
  %v951 = vmul.f32 %v912, %v936
  %v952 = vmul.f32 %v913, %v940
  %v953 = vmul.f32 %v914, %v928
  %v954 = vmul.f32 %v915, %v932
  %v955 = vmul.f32 %v916, %v936
  %v956 = vmul.f32 %v917, %v940
  %v957 = vmul.f32 %v918, %v928
  %v958 = vmul.f32 %v919, %v932
  %v959 = vmul.f32 %v920, %v936
  %v960 = vmul.f32 %v921, %v940
  %v961 = vadd.f32 %v490, %v945
  %v962 = vadd.f32 %v492, %v946
  %v963 = vadd.f32 %v812, %v947
  %v964 = vadd.f32 %v814, %v948
  %v965 = vadd.f32 %v496, %v949
  %v966 = vadd.f32 %v498, %v950
  %v967 = vadd.f32 %v818, %v951
  %v968 = vadd.f32 %v820, %v952
  %v969 = vadd.f32 %v502, %v953
  %v970 = vadd.f32 %v504, %v954
  %v971 = vadd.f32 %v824, %v955
  %v972 = vadd.f32 %v826, %v956
  %v973 = vadd.f32 %v508, %v957
  %v974 = vadd.f32 %v510, %v958
  %v975 = vadd.f32 %v830, %v959
  %v976 = vadd.f32 %v832, %v960
  %v977 = vxor.u32 %v961, 2147483648
  %v978 = vxor.u32 %v962, 2147483648
  %v979 = vxor.u32 %v963, 2147483648
  %v980 = vxor.u32 %v964, 2147483648
  %v981 = vxor.u32 %v965, 2147483648
  %v982 = vxor.u32 %v966, 2147483648
  %v983 = vxor.u32 %v967, 2147483648
  %v984 = vxor.u32 %v968, 2147483648
  %v985 = vxor.u32 %v969, 2147483648
  %v986 = vxor.u32 %v970, 2147483648
  %v987 = vxor.u32 %v971, 2147483648
  %v988 = vxor.u32 %v972, 2147483648
  %v989 = vxor.u32 %v973, 2147483648
  %v990 = vxor.u32 %v974, 2147483648
  %v991 = vxor.u32 %v975, 2147483648
  %v992 = vxor.u32 %v976, 2147483648
  %v993 = vmul.f32 %v977, 1.442695
  %v994 = vpow.pop %v993
  %v995 = vmul.f32 %v978, 1.442695
  %v996 = vpow.pop %v995
  %v997 = vmul.f32 %v979, 1.442695
  %v998 = vpow.pop %v997
  %v999 = vmul.f32 %v980, 1.442695
  %v1000 = vpow.pop %v999
  %v1001 = vmul.f32 %v981, 1.442695
  %v1002 = vpow.pop %v1001
  %v1003 = vmul.f32 %v982, 1.442695
  %v1004 = vpow.pop %v1003
  %v1005 = vmul.f32 %v983, 1.442695
  %v1006 = vpow.pop %v1005
  %v1007 = vmul.f32 %v984, 1.442695
  %v1008 = vpow.pop %v1007
  %v1009 = vmul.f32 %v985, 1.442695
  %v1010 = vpow.pop %v1009
  %v1011 = vmul.f32 %v986, 1.442695
  %v1012 = vpow.pop %v1011
  %v1013 = vmul.f32 %v987, 1.442695
  %v1014 = vpow.pop %v1013
  %v1015 = vmul.f32 %v988, 1.442695
  %v1016 = vpow.pop %v1015
  %v1017 = vmul.f32 %v989, 1.442695
  %v1018 = vpow.pop %v1017
  %v1019 = vmul.f32 %v990, 1.442695
  %v1020 = vpow.pop %v1019
  %v1021 = vmul.f32 %v991, 1.442695
  %v1022 = vpow.pop %v1021
  %v1023 = vmul.f32 %v992, 1.442695
  %v1024 = vpow.pop %v1023
  %v1025 = vadd.f32 %v994, 1.0
  %v1026 = vadd.f32 %v996, 1.0
  %v1027 = vadd.f32 %v998, 1.0
  %v1028 = vadd.f32 %v1000, 1.0
  %v1029 = vadd.f32 %v1002, 1.0
  %v1030 = vadd.f32 %v1004, 1.0
  %v1031 = vadd.f32 %v1006, 1.0
  %v1032 = vadd.f32 %v1008, 1.0
  %v1033 = vadd.f32 %v1010, 1.0
  %v1034 = vadd.f32 %v1012, 1.0
  %v1035 = vadd.f32 %v1014, 1.0
  %v1036 = vadd.f32 %v1016, 1.0
  %v1037 = vadd.f32 %v1018, 1.0
  %v1038 = vadd.f32 %v1020, 1.0
  %v1039 = vadd.f32 %v1022, 1.0
  %v1040 = vadd.f32 %v1024, 1.0
  %v1041 = vrcp.pop %v1025
  %v1042 = vmul.f32 1.0, %v1041
  %v1043 = vrcp.pop %v1026
  %v1044 = vmul.f32 1.0, %v1043
  %v1045 = vrcp.pop %v1027
  %v1046 = vmul.f32 1.0, %v1045
  %v1047 = vrcp.pop %v1028
  %v1048 = vmul.f32 1.0, %v1047
  %v1049 = vrcp.pop %v1029
  %v1050 = vmul.f32 1.0, %v1049
  %v1051 = vrcp.pop %v1030
  %v1052 = vmul.f32 1.0, %v1051
  %v1053 = vrcp.pop %v1031
  %v1054 = vmul.f32 1.0, %v1053
  %v1055 = vrcp.pop %v1032
  %v1056 = vmul.f32 1.0, %v1055
  %v1057 = vrcp.pop %v1033
  %v1058 = vmul.f32 1.0, %v1057
  %v1059 = vrcp.pop %v1034
  %v1060 = vmul.f32 1.0, %v1059
  %v1061 = vrcp.pop %v1035
  %v1062 = vmul.f32 1.0, %v1061
  %v1063 = vrcp.pop %v1036
  %v1064 = vmul.f32 1.0, %v1063
  %v1065 = vrcp.pop %v1037
  %v1066 = vmul.f32 1.0, %v1065
  %v1067 = vrcp.pop %v1038
  %v1068 = vmul.f32 1.0, %v1067
  %v1069 = vrcp.pop %v1039
  %v1070 = vmul.f32 1.0, %v1069
  %v1071 = vrcp.pop %v1040
  %v1072 = vmul.f32 1.0, %v1071
  %v1074 = vlaneseq
  %v1075 = vshrl.u32 %v1074, 7
  %v1076 = vsub.s32 0, %v1075
  %v1077 = vrot.slane %v923, %v1076
  %v1078 = vlaneseq
  %v1079 = vshrl.u32 %v1078, 7
  %v1080 = vsub.s32 1, %v1079
  %v1081 = vrot.slane %v923, %v1080
  %v1082 = vlaneseq
  %v1083 = vshrl.u32 %v1082, 7
  %v1084 = vsub.s32 2, %v1083
  %v1085 = vrot.slane %v923, %v1084
  %v1086 = vlaneseq
  %v1087 = vshrl.u32 %v1086, 7
  %v1088 = vsub.s32 3, %v1087
  %v1089 = vrot.slane %v923, %v1088
  %v1094 = vmul.f32 %v906, %v1077
  %v1095 = vmul.f32 %v907, %v1081
  %v1096 = vmul.f32 %v908, %v1085
  %v1097 = vmul.f32 %v909, %v1089
  %v1098 = vmul.f32 %v910, %v1077
  %v1099 = vmul.f32 %v911, %v1081
  %v1100 = vmul.f32 %v912, %v1085
  %v1101 = vmul.f32 %v913, %v1089
  %v1102 = vmul.f32 %v914, %v1077
  %v1103 = vmul.f32 %v915, %v1081
  %v1104 = vmul.f32 %v916, %v1085
  %v1105 = vmul.f32 %v917, %v1089
  %v1106 = vmul.f32 %v918, %v1077
  %v1107 = vmul.f32 %v919, %v1081
  %v1108 = vmul.f32 %v920, %v1085
  %v1109 = vmul.f32 %v921, %v1089
  %v1110 = vadd.f32 %v514, %v1094
  %v1111 = vadd.f32 %v516, %v1095
  %v1112 = vadd.f32 %v836, %v1096
  %v1113 = vadd.f32 %v838, %v1097
  %v1114 = vadd.f32 %v520, %v1098
  %v1115 = vadd.f32 %v522, %v1099
  %v1116 = vadd.f32 %v842, %v1100
  %v1117 = vadd.f32 %v844, %v1101
  %v1118 = vadd.f32 %v526, %v1102
  %v1119 = vadd.f32 %v528, %v1103
  %v1120 = vadd.f32 %v848, %v1104
  %v1121 = vadd.f32 %v850, %v1105
  %v1122 = vadd.f32 %v532, %v1106
  %v1123 = vadd.f32 %v534, %v1107
  %v1124 = vadd.f32 %v854, %v1108
  %v1125 = vadd.f32 %v856, %v1109
  %v1126 = vxor.u32 %v1110, 2147483648
  %v1127 = vxor.u32 %v1111, 2147483648
  %v1128 = vxor.u32 %v1112, 2147483648
  %v1129 = vxor.u32 %v1113, 2147483648
  %v1130 = vxor.u32 %v1114, 2147483648
  %v1131 = vxor.u32 %v1115, 2147483648
  %v1132 = vxor.u32 %v1116, 2147483648
  %v1133 = vxor.u32 %v1117, 2147483648
  %v1134 = vxor.u32 %v1118, 2147483648
  %v1135 = vxor.u32 %v1119, 2147483648
  %v1136 = vxor.u32 %v1120, 2147483648
  %v1137 = vxor.u32 %v1121, 2147483648
  %v1138 = vxor.u32 %v1122, 2147483648
  %v1139 = vxor.u32 %v1123, 2147483648
  %v1140 = vxor.u32 %v1124, 2147483648
  %v1141 = vxor.u32 %v1125, 2147483648
  %v1142 = vmul.f32 %v1126, 1.442695
  %v1143 = vpow.pop %v1142
  %v1144 = vmul.f32 %v1127, 1.442695
  %v1145 = vpow.pop %v1144
  %v1146 = vmul.f32 %v1128, 1.442695
  %v1147 = vpow.pop %v1146
  %v1148 = vmul.f32 %v1129, 1.442695
  %v1149 = vpow.pop %v1148
  %v1150 = vmul.f32 %v1130, 1.442695
  %v1151 = vpow.pop %v1150
  %v1152 = vmul.f32 %v1131, 1.442695
  %v1153 = vpow.pop %v1152
  %v1154 = vmul.f32 %v1132, 1.442695
  %v1155 = vpow.pop %v1154
  %v1156 = vmul.f32 %v1133, 1.442695
  %v1157 = vpow.pop %v1156
  %v1158 = vmul.f32 %v1134, 1.442695
  %v1159 = vpow.pop %v1158
  %v1160 = vmul.f32 %v1135, 1.442695
  %v1161 = vpow.pop %v1160
  %v1162 = vmul.f32 %v1136, 1.442695
  %v1163 = vpow.pop %v1162
  %v1164 = vmul.f32 %v1137, 1.442695
  %v1165 = vpow.pop %v1164
  %v1166 = vmul.f32 %v1138, 1.442695
  %v1167 = vpow.pop %v1166
  %v1168 = vmul.f32 %v1139, 1.442695
  %v1169 = vpow.pop %v1168
  %v1170 = vmul.f32 %v1140, 1.442695
  %v1171 = vpow.pop %v1170
  %v1172 = vmul.f32 %v1141, 1.442695
  %v1173 = vpow.pop %v1172
  %v1174 = vadd.f32 %v1143, 1.0
  %v1175 = vadd.f32 %v1145, 1.0
  %v1176 = vadd.f32 %v1147, 1.0
  %v1177 = vadd.f32 %v1149, 1.0
  %v1178 = vadd.f32 %v1151, 1.0
  %v1179 = vadd.f32 %v1153, 1.0
  %v1180 = vadd.f32 %v1155, 1.0
  %v1181 = vadd.f32 %v1157, 1.0
  %v1182 = vadd.f32 %v1159, 1.0
  %v1183 = vadd.f32 %v1161, 1.0
  %v1184 = vadd.f32 %v1163, 1.0
  %v1185 = vadd.f32 %v1165, 1.0
  %v1186 = vadd.f32 %v1167, 1.0
  %v1187 = vadd.f32 %v1169, 1.0
  %v1188 = vadd.f32 %v1171, 1.0
  %v1189 = vadd.f32 %v1173, 1.0
  %v1190 = vrcp.pop %v1174
  %v1191 = vmul.f32 1.0, %v1190
  %v1192 = vrcp.pop %v1175
  %v1193 = vmul.f32 1.0, %v1192
  %v1194 = vrcp.pop %v1176
  %v1195 = vmul.f32 1.0, %v1194
  %v1196 = vrcp.pop %v1177
  %v1197 = vmul.f32 1.0, %v1196
  %v1198 = vrcp.pop %v1178
  %v1199 = vmul.f32 1.0, %v1198
  %v1200 = vrcp.pop %v1179
  %v1201 = vmul.f32 1.0, %v1200
  %v1202 = vrcp.pop %v1180
  %v1203 = vmul.f32 1.0, %v1202
  %v1204 = vrcp.pop %v1181
  %v1205 = vmul.f32 1.0, %v1204
  %v1206 = vrcp.pop %v1182
  %v1207 = vmul.f32 1.0, %v1206
  %v1208 = vrcp.pop %v1183
  %v1209 = vmul.f32 1.0, %v1208
  %v1210 = vrcp.pop %v1184
  %v1211 = vmul.f32 1.0, %v1210
  %v1212 = vrcp.pop %v1185
  %v1213 = vmul.f32 1.0, %v1212
  %v1214 = vrcp.pop %v1186
  %v1215 = vmul.f32 1.0, %v1214
  %v1216 = vrcp.pop %v1187
  %v1217 = vmul.f32 1.0, %v1216
  %v1218 = vrcp.pop %v1188
  %v1219 = vmul.f32 1.0, %v1218
  %v1220 = vrcp.pop %v1189
  %v1221 = vmul.f32 1.0, %v1220
  %v1222 = vmul.f32 %v1191, %v906
  %v1223 = vmul.f32 %v1193, %v907
  %v1224 = vmul.f32 %v1195, %v908
  %v1225 = vmul.f32 %v1197, %v909
  %v1226 = vmul.f32 %v1199, %v910
  %v1227 = vmul.f32 %v1201, %v911
  %v1228 = vmul.f32 %v1203, %v912
  %v1229 = vmul.f32 %v1205, %v913
  %v1230 = vmul.f32 %v1207, %v914
  %v1231 = vmul.f32 %v1209, %v915
  %v1232 = vmul.f32 %v1211, %v916
  %v1233 = vmul.f32 %v1213, %v917
  %v1234 = vmul.f32 %v1215, %v918
  %v1235 = vmul.f32 %v1217, %v919
  %v1236 = vmul.f32 %v1219, %v920
  %v1237 = vmul.f32 %v1221, %v921
  %v1238 = vtanh.pop %v562
  %v1239 = vtanh.pop %v564
  %v1240 = vtanh.pop %v884
  %v1241 = vtanh.pop %v886
  %v1242 = vtanh.pop %v568
  %v1243 = vtanh.pop %v570
  %v1244 = vtanh.pop %v890
  %v1245 = vtanh.pop %v892
  %v1246 = vtanh.pop %v574
  %v1247 = vtanh.pop %v576
  %v1248 = vtanh.pop %v896
  %v1249 = vtanh.pop %v898
  %v1250 = vtanh.pop %v580
  %v1251 = vtanh.pop %v582
  %v1252 = vtanh.pop %v902
  %v1253 = vtanh.pop %v904
  %v1254 = vmul.f32 %v1042, %v1238
  %v1255 = vmul.f32 %v1044, %v1239
  %v1256 = vmul.f32 %v1046, %v1240
  %v1257 = vmul.f32 %v1048, %v1241
  %v1258 = vmul.f32 %v1050, %v1242
  %v1259 = vmul.f32 %v1052, %v1243
  %v1260 = vmul.f32 %v1054, %v1244
  %v1261 = vmul.f32 %v1056, %v1245
  %v1262 = vmul.f32 %v1058, %v1246
  %v1263 = vmul.f32 %v1060, %v1247
  %v1264 = vmul.f32 %v1062, %v1248
  %v1265 = vmul.f32 %v1064, %v1249
  %v1266 = vmul.f32 %v1066, %v1250
  %v1267 = vmul.f32 %v1068, %v1251
  %v1268 = vmul.f32 %v1070, %v1252
  %v1269 = vmul.f32 %v1072, %v1253
  %v1270 = vadd.f32 %v1222, %v1254
  %v1271 = vadd.f32 %v1223, %v1255
  %v1272 = vadd.f32 %v1224, %v1256
  %v1273 = vadd.f32 %v1225, %v1257
  %v1274 = vadd.f32 %v1226, %v1258
  %v1275 = vadd.f32 %v1227, %v1259
  %v1276 = vadd.f32 %v1228, %v1260
  %v1277 = vadd.f32 %v1229, %v1261
  %v1278 = vadd.f32 %v1230, %v1262
  %v1279 = vadd.f32 %v1231, %v1263
  %v1280 = vadd.f32 %v1232, %v1264
  %v1281 = vadd.f32 %v1233, %v1265
  %v1282 = vadd.f32 %v1234, %v1266
  %v1283 = vadd.f32 %v1235, %v1267
  %v1284 = vadd.f32 %v1236, %v1268
  %v1285 = vadd.f32 %v1237, %v1269
  %v1286 = vmul.f32 %v1270, %v1077
  %v1287 = vmul.f32 %v1271, %v1081
  %v1288 = vmul.f32 %v1272, %v1085
  %v1289 = vmul.f32 %v1273, %v1089
  %v1290 = vmul.f32 %v1274, %v1077
  %v1291 = vmul.f32 %v1275, %v1081
  %v1292 = vmul.f32 %v1276, %v1085
  %v1293 = vmul.f32 %v1277, %v1089
  %v1294 = vmul.f32 %v1278, %v1077
  %v1295 = vmul.f32 %v1279, %v1081
  %v1296 = vmul.f32 %v1280, %v1085
  %v1297 = vmul.f32 %v1281, %v1089
  %v1298 = vmul.f32 %v1282, %v1077
  %v1299 = vmul.f32 %v1283, %v1081
  %v1300 = vmul.f32 %v1284, %v1085
  %v1301 = vmul.f32 %v1285, %v1089
  %v1302 = vadd.f32 %v538, %v1286
  %v1303 = vadd.f32 %v540, %v1287
  %v1304 = vadd.f32 %v860, %v1288
  %v1305 = vadd.f32 %v862, %v1289
  %v1306 = vadd.f32 %v544, %v1290
  %v1307 = vadd.f32 %v546, %v1291
  %v1308 = vadd.f32 %v866, %v1292
  %v1309 = vadd.f32 %v868, %v1293
  %v1310 = vadd.f32 %v550, %v1294
  %v1311 = vadd.f32 %v552, %v1295
  %v1312 = vadd.f32 %v872, %v1296
  %v1313 = vadd.f32 %v874, %v1297
  %v1314 = vadd.f32 %v556, %v1298
  %v1315 = vadd.f32 %v558, %v1299
  %v1316 = vadd.f32 %v878, %v1300
  %v1317 = vadd.f32 %v880, %v1301
  %v1318 = vxor.u32 %v1302, 2147483648
  %v1319 = vxor.u32 %v1303, 2147483648
  %v1320 = vxor.u32 %v1304, 2147483648
  %v1321 = vxor.u32 %v1305, 2147483648
  %v1322 = vxor.u32 %v1306, 2147483648
  %v1323 = vxor.u32 %v1307, 2147483648
  %v1324 = vxor.u32 %v1308, 2147483648
  %v1325 = vxor.u32 %v1309, 2147483648
  %v1326 = vxor.u32 %v1310, 2147483648
  %v1327 = vxor.u32 %v1311, 2147483648
  %v1328 = vxor.u32 %v1312, 2147483648
  %v1329 = vxor.u32 %v1313, 2147483648
  %v1330 = vxor.u32 %v1314, 2147483648
  %v1331 = vxor.u32 %v1315, 2147483648
  %v1332 = vxor.u32 %v1316, 2147483648
  %v1333 = vxor.u32 %v1317, 2147483648
  %v1334 = vmul.f32 %v1318, 1.442695
  %v1335 = vpow.pop %v1334
  %v1336 = vmul.f32 %v1319, 1.442695
  %v1337 = vpow.pop %v1336
  %v1338 = vmul.f32 %v1320, 1.442695
  %v1339 = vpow.pop %v1338
  %v1340 = vmul.f32 %v1321, 1.442695
  %v1341 = vpow.pop %v1340
  %v1342 = vmul.f32 %v1322, 1.442695
  %v1343 = vpow.pop %v1342
  %v1344 = vmul.f32 %v1323, 1.442695
  %v1345 = vpow.pop %v1344
  %v1346 = vmul.f32 %v1324, 1.442695
  %v1347 = vpow.pop %v1346
  %v1348 = vmul.f32 %v1325, 1.442695
  %v1349 = vpow.pop %v1348
  %v1350 = vmul.f32 %v1326, 1.442695
  %v1351 = vpow.pop %v1350
  %v1352 = vmul.f32 %v1327, 1.442695
  %v1353 = vpow.pop %v1352
  %v1354 = vmul.f32 %v1328, 1.442695
  %v1355 = vpow.pop %v1354
  %v1356 = vmul.f32 %v1329, 1.442695
  %v1357 = vpow.pop %v1356
  %v1358 = vmul.f32 %v1330, 1.442695
  %v1359 = vpow.pop %v1358
  %v1360 = vmul.f32 %v1331, 1.442695
  %v1361 = vpow.pop %v1360
  %v1362 = vmul.f32 %v1332, 1.442695
  %v1363 = vpow.pop %v1362
  %v1364 = vmul.f32 %v1333, 1.442695
  %v1365 = vpow.pop %v1364
  %v1366 = vadd.f32 %v1335, 1.0
  %v1367 = vadd.f32 %v1337, 1.0
  %v1368 = vadd.f32 %v1339, 1.0
  %v1369 = vadd.f32 %v1341, 1.0
  %v1370 = vadd.f32 %v1343, 1.0
  %v1371 = vadd.f32 %v1345, 1.0
  %v1372 = vadd.f32 %v1347, 1.0
  %v1373 = vadd.f32 %v1349, 1.0
  %v1374 = vadd.f32 %v1351, 1.0
  %v1375 = vadd.f32 %v1353, 1.0
  %v1376 = vadd.f32 %v1355, 1.0
  %v1377 = vadd.f32 %v1357, 1.0
  %v1378 = vadd.f32 %v1359, 1.0
  %v1379 = vadd.f32 %v1361, 1.0
  %v1380 = vadd.f32 %v1363, 1.0
  %v1381 = vadd.f32 %v1365, 1.0
  %v1382 = vrcp.pop %v1366
  %v1383 = vmul.f32 1.0, %v1382
  %v1384 = vrcp.pop %v1367
  %v1385 = vmul.f32 1.0, %v1384
  %v1386 = vrcp.pop %v1368
  %v1387 = vmul.f32 1.0, %v1386
  %v1388 = vrcp.pop %v1369
  %v1389 = vmul.f32 1.0, %v1388
  %v1390 = vrcp.pop %v1370
  %v1391 = vmul.f32 1.0, %v1390
  %v1392 = vrcp.pop %v1371
  %v1393 = vmul.f32 1.0, %v1392
  %v1394 = vrcp.pop %v1372
  %v1395 = vmul.f32 1.0, %v1394
  %v1396 = vrcp.pop %v1373
  %v1397 = vmul.f32 1.0, %v1396
  %v1398 = vrcp.pop %v1374
  %v1399 = vmul.f32 1.0, %v1398
  %v1400 = vrcp.pop %v1375
  %v1401 = vmul.f32 1.0, %v1400
  %v1402 = vrcp.pop %v1376
  %v1403 = vmul.f32 1.0, %v1402
  %v1404 = vrcp.pop %v1377
  %v1405 = vmul.f32 1.0, %v1404
  %v1406 = vrcp.pop %v1378
  %v1407 = vmul.f32 1.0, %v1406
  %v1408 = vrcp.pop %v1379
  %v1409 = vmul.f32 1.0, %v1408
  %v1410 = vrcp.pop %v1380
  %v1411 = vmul.f32 1.0, %v1410
  %v1412 = vrcp.pop %v1381
  %v1413 = vmul.f32 1.0, %v1412
  %v1414 = vtanh.pop %v1270
  %v1415 = vtanh.pop %v1271
  %v1416 = vtanh.pop %v1272
  %v1417 = vtanh.pop %v1273
  %v1418 = vtanh.pop %v1274
  %v1419 = vtanh.pop %v1275
  %v1420 = vtanh.pop %v1276
  %v1421 = vtanh.pop %v1277
  %v1422 = vtanh.pop %v1278
  %v1423 = vtanh.pop %v1279
  %v1424 = vtanh.pop %v1280
  %v1425 = vtanh.pop %v1281
  %v1426 = vtanh.pop %v1282
  %v1427 = vtanh.pop %v1283
  %v1428 = vtanh.pop %v1284
  %v1429 = vtanh.pop %v1285
  %v1430 = vmul.f32 %v1383, %v1414
  %v1431 = vmul.f32 %v1385, %v1415
  %v1432 = vmul.f32 %v1387, %v1416
  %v1433 = vmul.f32 %v1389, %v1417
  %v1434 = vmul.f32 %v1391, %v1418
  %v1435 = vmul.f32 %v1393, %v1419
  %v1436 = vmul.f32 %v1395, %v1420
  %v1437 = vmul.f32 %v1397, %v1421
  %v1438 = vmul.f32 %v1399, %v1422
  %v1439 = vmul.f32 %v1401, %v1423
  %v1440 = vmul.f32 %v1403, %v1424
  %v1441 = vmul.f32 %v1405, %v1425
  %v1442 = vmul.f32 %v1407, %v1426
  %v1443 = vmul.f32 %v1409, %v1427
  %v1444 = vmul.f32 %v1411, %v1428
  %v1445 = vmul.f32 %v1413, %v1429
  %1446 = vst [vmem:[%s5] sm:$0xff] %v1430
  %1447 = vst [vmem:[%s5 + $0x8] sm:$0xff] %v1431
  %1448 = vst [vmem:[%s5 + $0x10] sm:$0xff] %v1432
  %1449 = vst [vmem:[%s5 + $0x18] sm:$0xff] %v1433
  %1450 = vst [vmem:[%s5 + $0x20] sm:$0xff] %v1434
  %1451 = vst [vmem:[%s5 + $0x28] sm:$0xff] %v1435
  %1452 = vst [vmem:[%s5 + $0x30] sm:$0xff] %v1436
  %1453 = vst [vmem:[%s5 + $0x38] sm:$0xff] %v1437
  %1454 = vst [vmem:[%s5 + $0x40] sm:$0xff] %v1438
  %1455 = vst [vmem:[%s5 + $0x48] sm:$0xff] %v1439
  %1456 = vst [vmem:[%s5 + $0x50] sm:$0xff] %v1440
  %1457 = vst [vmem:[%s5 + $0x58] sm:$0xff] %v1441
  %1458 = vst [vmem:[%s5 + $0x60] sm:$0xff] %v1442
  %1459 = vst [vmem:[%s5 + $0x68] sm:$0xff] %v1443
  %1460 = vst [vmem:[%s5 + $0x70] sm:$0xff] %v1444
  %1461 = vst [vmem:[%s5 + $0x78] sm:$0xff] %v1445
  %1462 = vst [vmem:[%s6] sm:$0xff] %v1270
  %1463 = vst [vmem:[%s6 + $0x8] sm:$0xff] %v1271
  %1464 = vst [vmem:[%s6 + $0x10] sm:$0xff] %v1272
  %1465 = vst [vmem:[%s6 + $0x18] sm:$0xff] %v1273
  %1466 = vst [vmem:[%s6 + $0x20] sm:$0xff] %v1274
  %1467 = vst [vmem:[%s6 + $0x28] sm:$0xff] %v1275
  %1468 = vst [vmem:[%s6 + $0x30] sm:$0xff] %v1276
  %1469 = vst [vmem:[%s6 + $0x38] sm:$0xff] %v1277
  %1470 = vst [vmem:[%s6 + $0x40] sm:$0xff] %v1278
  %1471 = vst [vmem:[%s6 + $0x48] sm:$0xff] %v1279
  %1472 = vst [vmem:[%s6 + $0x50] sm:$0xff] %v1280
  %1473 = vst [vmem:[%s6 + $0x58] sm:$0xff] %v1281
  %1474 = vst [vmem:[%s6 + $0x60] sm:$0xff] %v1282
  %1475 = vst [vmem:[%s6 + $0x68] sm:$0xff] %v1283
  %1476 = vst [vmem:[%s6 + $0x70] sm:$0xff] %v1284
  %1477 = vst [vmem:[%s6 + $0x78] sm:$0xff] %v1285
  // Predicated region
  $region22: #{marv_conv_lstm_cell.1} parent=0 // pred_check
    _
  $region23: #{marv_conv_lstm_cell.1} parent=0 // pred_check_branch
    %1479 = sbr.rel (0) target = $region25
  $region24: #{marv_conv_lstm_cell.1} parent=0 // pred_region
    _
  $region25: #{marv_conv_lstm_cell.1} parent=0 // pred_fallthru
    _
  // Predicated region
  $region26: #{marv_conv_lstm_cell.1} parent=0 // pred_check
    _
  $region27: #{marv_conv_lstm_cell.1} parent=0 // pred_check_branch
    %1481 = sbr.rel (0) target = $region29
  $region28: #{marv_conv_lstm_cell.1} parent=0 // pred_region
    _
  $region29: #{marv_conv_lstm_cell.1} parent=0 // pred_fallthru
    _
  // Predicated region
  $region30: #{marv_conv_lstm_cell.1} parent=0 // pred_check
    _
  $region31: #{marv_conv_lstm_cell.1} parent=0 // pred_check_branch
    %1483 = sbr.rel (0) target = $region33
  $region32: #{marv_conv_lstm_cell.1} parent=0 // pred_region
    _
  $region33: #{marv_conv_lstm_cell.1} parent=0 // pred_fallthru
    _
  // Predicated region
  $region34: #{marv_conv_lstm_cell.1} parent=0 // pred_check
    _
  $region35: #{marv_conv_lstm_cell.1} parent=0 // pred_check_branch
    %1485 = sbr.rel (0) target = $region37
  $region36: #{marv_conv_lstm_cell.1} parent=0 // pred_region
    _
  $region37: #{marv_conv_lstm_cell.1} parent=0 // pred_fallthru
    _

</llo_original>
